<compile_context>
chip_gen: v6e
topology: v6e:2x2x1
jax: 0.10.0
libtpu: 0.0.40
codegen_flags: <defaults>
</compile_context>

<pallas_src>
import jax
import jax.numpy as jnp
from jax import lax
from jax.experimental import pallas as pl
from jax.experimental.pallas import tpu as pltpu

TEMPERATURE = 0.07            # InfoNCE temperature (matches InfoNCE.__init__)
INV_TEMP = 1.0 / TEMPERATURE  # compile-time reciprocal -> plain multiply in-kernel
EPS = 1e-12                   # F.normalize eps

_VMEM_BUDGET = 40 * 2**20     # live-VMEM target used for block_b auto-selection
_VMEM_LIMIT_CAP = 56 * 2**20  # never request more scoped VMEM than this (v7x: 64 MiB phys)


def _l2_normalize(x):
    """x / max(||x||_2, EPS) along last axis, via rsqrt (EUP) instead of sqrt + divide."""
    ss = jnp.sum(x * x, axis=-1, keepdims=True)
    return x * lax.rsqrt(jnp.maximum(ss, EPS * EPS))


def _padded_tile_bytes(rows, cols, itemsize):
    """VMEM bytes of a (rows, cols) tile after (sublane, 128-lane) padding."""
    sub = 8 * max(1, 4 // itemsize)
    prows = -(-rows // sub) * sub
    pcols = -(-cols // 128) * 128
    return prows * pcols * itemsize


def _make_kernel(batch, d, nk, nn, tiles_per_split):
    inv_b = 1.0 / batch
    inv_nk = 1.0 / nk
    last = tiles_per_split - 1

    def kernel(scale_ref,                    # (1,1) f32 in SMEM: logit_scale_inter
               cls_v_hbm, cls_t_hbm,         # (B,D) HBM refs (memory_space=ANY)
               key_v_ref, key_t_ref,         # (bb, Nk*D) streaming tiles (native dtype)
               nk_v_ref, nk_t_ref,           # (bb, Nn*D) streaming tiles (native dtype)
               inter_ref, intra_ref,         # (1,1,1) f32 per-split partial outputs
               acc_ref,                      # (1,1) f32 VMEM scratch (intra accumulator)
               cv_buf, ct_buf, cls_sem):     # cls landing buffers + DMA semaphores
        c = pl.program_id(0)                 # core-split index (parallel)
        i = pl.program_id(1)                 # batch-tile index within split (arbitrary)
        is_final = jnp.logical_and(c == 0, i == last)

        @pl.when(i == 0)
        def _init():
            acc_ref[...] = jnp.zeros_like(acc_ref)

        def cls_copies():
            return (pltpu.make_async_copy(cls_v_hbm, cv_buf, cls_sem.at[0]),
                    pltpu.make_async_copy(cls_t_hbm, ct_buf, cls_sem.at[1]))

        # Kick off the tiny cls DMA at the start of core-split 0's last step so it
        # overlaps with this step's intra compute (cls is never resident in the pipeline).
        @pl.when(is_final)
        def _start_cls_dma():
            for cp in cls_copies():
                cp.start()

        # -------- intra-contrastive (per-sample InfoNCE) for this batch tile --------
        # Tiles are dense 2-D slabs (bb, n*D): every per-clip read is a static lane
        # slice; only (bb, D) slices are upcast to f32 (no whole-tile upcast, no MXU).
        def clip_mean(ref):
            acc = ref[:, pl.ds(0, d)].astype(jnp.float32)
            for j in range(1, nk):           # Nk is small & static -> unrolled
                acc = acc + ref[:, pl.ds(j * d, d)].astype(jnp.float32)
            return acc * inv_nk

        q_v = _l2_normalize(clip_mean(key_v_ref))                               # (bb,D)
        q_t = _l2_normalize(clip_mean(key_t_ref))                               # (bb,D)

        def info_nce(q, k, neg_ref):
            # q, k: (bb,D) f32 L2-normalized; neg_ref: (bb, Nn*D) raw, native dtype.
            # Positive is class 0 -> loss = logsumexp([l_pos, l_neg]) - l_pos.
            # Online logsumexp over the negatives: each negative clip is read once and
            # its dot-with-q and squared norm come from the same f32 slice (fused).
            l_pos = jnp.sum(q * k, axis=-1, keepdims=True) * INV_TEMP           # (bb,1)
            m = l_pos
            s = jnp.ones_like(l_pos)         # == exp(l_pos - m)
            for j in range(nn):              # Nn is small & static -> unrolled
                nj = neg_ref[:, pl.ds(j * d, d)].astype(jnp.float32)            # (bb,D)
                dot_j = jnp.sum(q * nj, axis=-1, keepdims=True)                 # (bb,1)
                sq_j = jnp.sum(nj * nj, axis=-1, keepdims=True)                 # (bb,1)
                l_j = dot_j * lax.rsqrt(jnp.maximum(sq_j, EPS * EPS)) * INV_TEMP
                m_new = jnp.maximum(m, l_j)
                s = s * jnp.exp(m - m_new) + jnp.exp(l_j - m_new)
                m = m_new
            return (m + jnp.log(s)) - l_pos                                     # (bb,1)

        tile_loss = 0.5 * (info_nce(q_v, q_t, nk_v_ref) + info_nce(q_t, q_v, nk_t_ref))
        acc_ref[...] += jnp.sum(tile_loss, axis=0, keepdims=True)               # (1,1)

        @pl.when(i == last)
        def _write_intra():
            # per-split partial, already divided by B; the wrapper sums the splits.
            intra_ref[...] = (acc_ref[...] * inv_b).reshape(1, 1, 1)

        # ------------- inter-contrastive (CLIP) loss: only split 0, last tile -------
        @pl.when(is_final)
        def _finalize_inter():
            for cp in cls_copies():
                cp.wait()
            cv = _l2_normalize(cv_buf[...].astype(jnp.float32))                 # (B,D)
            ct = _l2_normalize(ct_buf[...].astype(jnp.float32))                 # (B,D)
            # splat the SMEM scalar into a (1,1) vreg so exp runs on the EUP
            scale = jnp.exp(jnp.zeros((1, 1), jnp.float32) + scale_ref[0, 0])   # (1,1)
            # f32 operands (runs once, off the streaming critical path).
            logits = lax.dot_general(cv, ct, (((1,), (1,)), ((), ())),
                                     preferred_element_type=jnp.float32) * scale  # (B,B)
            # diagonal via a row-wise dot (no iota / mask / masked (B,B) reduces)
            diag = jnp.sum(cv * ct, axis=-1, keepdims=True) * scale             # (B,1)
            m1 = jnp.max(logits, axis=1, keepdims=True)
            lse_row = m1 + jnp.log(jnp.sum(jnp.exp(logits - m1), axis=1, keepdims=True))
            m0 = jnp.max(logits, axis=0, keepdims=True)
            lse_col = m0 + jnp.log(jnp.sum(jnp.exp(logits - m0), axis=0, keepdims=True))
            inter = (0.5 * (jnp.mean(lse_row, axis=0, keepdims=True)
                            + jnp.mean(lse_col, axis=1, keepdims=True))
                     - jnp.mean(diag, axis=0, keepdims=True))                   # (1,1)
            inter_ref[...] = inter.reshape(1, 1, 1)

        @pl.when(jnp.logical_and(c != 0, i == last))
        def _zero_inter():
            inter_ref[...] = jnp.zeros_like(inter_ref)

    return kernel


def dual_contrastive_loss(logit_scale, cls_video, cls_text,
                          key_video, key_text, nonkey_video, nonkey_text,
                          *, block_b=None, num_splits=None,
                          vmem_budget_bytes=_VMEM_BUDGET):
    """cls_*: (B,1,D); key_*: (B,Nk,D); nonkey_*: (B,Nn,D) (stacked python lists).

    Returns (inter_contrastive_loss, intra_contrastive_loss) as f32 scalars.
    """
    # TODO(synk): variable-length key/nonkey lists per sample would need padding + a
    # validity mask; fixed (Nk, Nn) is assumed. The len(pairs)==0 early-return of the
    # PyTorch module is host-side control flow left to the caller.
    cls_v = jnp.squeeze(cls_video, axis=1)   # native dtype; no f32 cast in the wrapper
    cls_t = jnp.squeeze(cls_text, axis=1)
    B, D = cls_v.shape
    Nk = key_video.shape[1]
    Nn = nonkey_video.shape[1]

    # Fold the clip axis into lanes -> dense 2-D slabs for both the HBM->VMEM DMA and
    # the VMEM layout (no (Nk,D)/(Nn,D) sublane padding). Pure-metadata reshape.
    key_v = key_video.reshape(B, Nk * D)
    key_t = key_text.reshape(B, Nk * D)
    nk_v = nonkey_video.reshape(B, Nn * D)
    nk_t = nonkey_text.reshape(B, Nn * D)

    big_it = jnp.dtype(key_v.dtype).itemsize
    cls_it = jnp.dtype(cls_v.dtype).itemsize
    sub = 8 * max(1, 4 // big_it)            # sublane multiple for a valid tiled block

    def live_vmem(bb):
        # 2 pipeline buffers x (key_v + key_t + nonkey_v + nonkey_t) streaming tiles
        stream = 2 * 2 * (_padded_tile_bytes(bb, Nk * D, big_it)
                          + _padded_tile_bytes(bb, Nn * D, big_it))
        temps = 16 * _padded_tile_bytes(bb, D, 4)                 # f32 (bb,D) slices
        resident = (2 * _padded_tile_bytes(B, D, cls_it)          # cls landing buffers
                    + _padded_tile_bytes(B, B, 4) + (1 << 16))    # CLIP logits + misc
        return stream + temps + resident

    if block_b is None:
        cands = [bb for bb in range(B, 0, -1)
                 if B % bb == 0 and (bb == B or bb % sub == 0)]
        fitting = [bb for bb in cands if live_vmem(bb) <= vmem_budget_bytes]
        block_b = None
        for bb in fitting:
            if B // bb >= 2:                 # keep >=2 tiles so the DMA pipeline overlaps
                block_b = bb
                break
        if block_b is None:
            block_b = fitting[0] if fitting else cands[-1]
    assert B % block_b == 0, "block_b must divide B"
    assert block_b == B or block_b % sub == 0, (
        f"block_b={block_b} must be a multiple of {sub} (or equal B) for dense tiles")

    num_tiles = B // block_b
    if num_splits is None:
        num_splits = 2 if num_tiles % 2 == 0 else 1   # v7x: one parallel shard per TC
    assert num_tiles % num_splits == 0, "num_splits must divide the number of tiles"
    tiles_per_split = num_tiles // num_splits

    vmem_limit = int(min(_VMEM_LIMIT_CAP,
                         max(32 * 2**20, int(live_vmem(block_b) * 1.5))))

    scale = jnp.reshape(logit_scale, (1, 1)).astype(jnp.float32)

    grid_spec = pltpu.PrefetchScalarGridSpec(
        num_scalar_prefetch=0,
        grid=(num_splits, tiles_per_split),
        in_specs=[
            # scalar parameter -> SMEM (scalar path), not a VMEM tile
            pl.BlockSpec(memory_space=pltpu.MemorySpace.SMEM),
            # cls blocks are only needed once (last step) -> raw HBM refs, manual DMA
            pl.BlockSpec(memory_space=pl.ANY),
            pl.BlockSpec(memory_space=pl.ANY),
            # streaming tensors: dense 2-D tiles, default double-buffered pipeline
            pl.BlockSpec((block_b, Nk * D), lambda c, i: (c * tiles_per_split + i, 0)),
            pl.BlockSpec((block_b, Nk * D), lambda c, i: (c * tiles_per_split + i, 0)),
            pl.BlockSpec((block_b, Nn * D), lambda c, i: (c * tiles_per_split + i, 0)),
            pl.BlockSpec((block_b, Nn * D), lambda c, i: (c * tiles_per_split + i, 0)),
        ],
        out_specs=[
            pl.BlockSpec((1, 1, 1), lambda c, i: (c, 0, 0)),  # per-split inter partial
            pl.BlockSpec((1, 1, 1), lambda c, i: (c, 0, 0)),  # per-split intra partial
        ],
        scratch_shapes=[
            pltpu.VMEM((1, 1), jnp.float32),        # intra accumulator
            pltpu.VMEM((B, D), cls_v.dtype),        # cls_video landing buffer
            pltpu.VMEM((B, D), cls_t.dtype),        # cls_text landing buffer
            pltpu.SemaphoreType.DMA((2,)),
        ],
    )
    inter, intra = pl.pallas_call(
        _make_kernel(B, D, Nk, Nn, tiles_per_split),
        out_shape=(jax.ShapeDtypeStruct((num_splits, 1, 1), jnp.float32),
                   jax.ShapeDtypeStruct((num_splits, 1, 1), jnp.float32)),
        grid_spec=grid_spec,
        compiler_params=pltpu.CompilerParams(
            dimension_semantics=("parallel", "arbitrary"),
            vmem_limit_bytes=vmem_limit),
    )(scale, cls_v, cls_t, key_v, key_t, nk_v, nk_t)
    return inter[0, 0, 0], jnp.sum(intra)


def _reference(logit_scale, cls_video, cls_text, key_v, key_t, nk_v, nk_t):
    """Pure-JAX f32 reference mirroring the PyTorch forward."""
    hp = jax.lax.Precision.HIGHEST
    f32 = jnp.float32

    def norm(x):
        n = jnp.linalg.norm(x, axis=-1, keepdims=True)
        return x / jnp.maximum(n, EPS)

    cv = norm(jnp.squeeze(cls_video, 1).astype(f32))
    ct = norm(jnp.squeeze(cls_text, 1).astype(f32))
    logits = jnp.exp(logit_scale.astype(f32)) * jnp.matmul(cv, ct.T, precision=hp)
    lv = jnp.mean(jax.nn.logsumexp(logits, axis=1) - jnp.diag(logits))
    lt = jnp.mean(jax.nn.logsumexp(logits.T, axis=1) - jnp.diag(logits))
    inter = 0.5 * (lv + lt)

    qv = norm(jnp.mean(key_v.astype(f32), axis=1))
    qt = norm(jnp.mean(key_t.astype(f32), axis=1))
    nv = norm(nk_v.astype(f32))
    nt = norm(nk_t.astype(f32))

    def info_nce(q, k, neg):
        lp = jnp.sum(q * k, -1) / TEMPERATURE
        ln = jnp.einsum('bd,bnd->bn', q, neg, precision=hp) / TEMPERATURE
        allv = jnp.concatenate([lp[:, None], ln], axis=1)
        return jax.nn.logsumexp(allv, axis=1) - lp

    intra = jnp.mean(0.5 * (info_nce(qv, qt, nv) + info_nce(qt, qv, nt)))
    return inter, intra


if __name__ == "__main__":
    B, D, Nk, Nn = 32, 32, 6, 8
    key = jax.random.PRNGKey(0)
    ks = jax.random.split(key, 6)
    cls_video = jax.random.normal(ks[0], (B, 1, D), jnp.float32)
    cls_text = jax.random.normal(ks[1], (B, 1, D), jnp.float32)
    key_video = jax.random.normal(ks[2], (B, Nk, D), jnp.float32)
    key_text = jax.random.normal(ks[3], (B, Nk, D), jnp.float32)
    nonkey_video = jax.random.normal(ks[4], (B, Nn, D), jnp.float32)
    nonkey_text = jax.random.normal(ks[5], (B, Nn, D), jnp.float32)
    # deterministic parameter init: logit_scale_inter = log(1/0.07)
    logit_scale = jnp.asarray(jnp.log(1.0 / 0.07), dtype=jnp.float32)

    ref_inter, ref_intra = _reference(
        logit_scale, cls_video, cls_text,
        key_video, key_text, nonkey_video, nonkey_text)

    # 1) f32 inputs, forced small tiles: grid = (2 splits, 2 tiles/split) -> exercises
    #    both the parallel core-split path and the multi-tile intra accumulation path.
    inter, intra = dual_contrastive_loss(
        logit_scale, cls_video, cls_text,
        key_video, key_text, nonkey_video, nonkey_text, block_b=8)
    jax.block_until_ready((inter, intra))
    assert jnp.allclose(inter, ref_inter, atol=1e-3, rtol=1e-3), (inter, ref_inter)
    assert jnp.allclose(intra, ref_intra, atol=1e-3, rtol=1e-3), (intra, ref_intra)

    # 2) default auto-selected (VMEM-budget-aware) block_b / splits.
    inter_a, intra_a = dual_contrastive_loss(
        logit_scale, cls_video, cls_text,
        key_video, key_text, nonkey_video, nonkey_text)
    jax.block_until_ready((inter_a, intra_a))
    assert jnp.allclose(inter_a, ref_inter, atol=1e-3, rtol=1e-3), (inter_a, ref_inter)
    assert jnp.allclose(intra_a, ref_intra, atol=1e-3, rtol=1e-3), (intra_a, ref_intra)

    # 3) native bf16 streaming tensors (production dtype): the kernel DMAs bf16 and
    #    upcasts only (block_b, D) slices; the reference sees the same rounded values.
    bf = jnp.bfloat16
    args_bf16 = [a.astype(bf) for a in (cls_video, cls_text, key_video, key_text,
                                        nonkey_video, nonkey_text)]
    ref_inter_b, ref_intra_b = _reference(logit_scale, *args_bf16)
    inter_b, intra_b = dual_contrastive_loss(logit_scale, *args_bf16)
    jax.block_until_ready((inter_b, intra_b))
    assert jnp.allclose(inter_b, ref_inter_b, atol=5e-3, rtol=5e-3), (inter_b, ref_inter_b)
    assert jnp.allclose(intra_b, ref_intra_b, atol=5e-3, rtol=5e-3), (intra_b, ref_intra_b)

    print("KERNEL_OK")
</pallas_src>

<mosaic_0001>
module attributes {stable_mosaic.version = 11 : i64} {
  func.func @kernel(%arg0: i32, %arg1: i32, %arg2: memref<1x1xf32, #tpu.memory_space<smem>>, %arg3: memref<32x32xf32, #tpu.memory_space<any>>, %arg4: memref<32x32xf32, #tpu.memory_space<any>>, %arg5: memref<8x192xf32, #tpu.memory_space<vmem>>, %arg6: memref<8x192xf32, #tpu.memory_space<vmem>>, %arg7: memref<8x256xf32, #tpu.memory_space<vmem>>, %arg8: memref<8x256xf32, #tpu.memory_space<vmem>>, %arg9: memref<1x1x1xf32, #tpu.memory_space<vmem>>, %arg10: memref<1x1x1xf32, #tpu.memory_space<vmem>>, %arg11: memref<1x1xf32, #tpu.memory_space<vmem>>, %arg12: memref<32x32xf32, #tpu.memory_space<vmem>>, %arg13: memref<32x32xf32, #tpu.memory_space<vmem>>, %arg14: memref<2x!tpu.dma_semaphore, #tpu.memory_space<semaphore_mem>>) attributes {dimension_semantics = [#tpu.dimension_semantics<parallel>, #tpu.dimension_semantics<arbitrary>], iteration_bounds = array<i64: 2, 2>, scalar_prefetch = 0 : i64, scratch_operands = 4 : i64, tpu.core_type = #tpu.core_type<tc>, window_params = [{transform_indices = @transform_0, window_bounds = array<i64: 1, 1>}, {}, {}, {transform_indices = @transform_3, window_bounds = array<i64: 8, 192>}, {transform_indices = @transform_4, window_bounds = array<i64: 8, 192>}, {transform_indices = @transform_5, window_bounds = array<i64: 8, 256>}, {transform_indices = @transform_6, window_bounds = array<i64: 8, 256>}, {transform_indices = @transform_7, window_bounds = array<i64: 1, 1, 1>}, {transform_indices = @transform_8, window_bounds = array<i64: 1, 1, 1>}]} {
    %c0_i32 = arith.constant 0 : i32
    %0 = arith.cmpi eq, %arg0, %c0_i32 : i32
    %c1_i32 = arith.constant 1 : i32
    %1 = arith.cmpi eq, %arg1, %c1_i32 : i32
    %2 = arith.andi %0, %1 : i1
    %c0_i32_0 = arith.constant 0 : i32
    %3 = arith.cmpi eq, %arg1, %c0_i32_0 : i32
    %4 = arith.extui %3 : i1 to i32
    %c0_i32_1 = arith.constant 0 : i32
    %5 = arith.cmpi ne, %4, %c0_i32_1 : i32
    scf.if %5 {
      %cst_138 = arith.constant 0.000000e+00 : f32
      %406 = vector.broadcast %cst_138 : f32 to vector<1x1xf32>
      %c0_139 = arith.constant 0 : index
      %c0_140 = arith.constant 0 : index
      %407 = vector.load %arg11[%c0_139, %c0_140] : memref<1x1xf32, #tpu.memory_space<vmem>>, vector<1x1xf32>
      tpu.vector_store %arg11[%c0_139, %c0_140], %406 {strides = array<i32>} : memref<1x1xf32, #tpu.memory_space<vmem>>, vector<1x1xf32>,
    } else {
    }
    %6 = arith.extui %2 : i1 to i32
    %c0_i32_2 = arith.constant 0 : i32
    %7 = arith.cmpi ne, %6, %c0_i32_2 : i32
    scf.if %7 {
      %c0_i32_138 = arith.constant 0 : i32
      %406 = tpu.memref_slice %arg14[%c0_i32_138] : memref<2x!tpu.dma_semaphore, #tpu.memory_space<semaphore_mem>> -> memref<1x!tpu.dma_semaphore, #tpu.memory_space<semaphore_mem>>
      %407 = tpu.memref_squeeze %406 : memref<1x!tpu.dma_semaphore, #tpu.memory_space<semaphore_mem>> -> memref<!tpu.dma_semaphore, #tpu.memory_space<semaphore_mem>>
      tpu.enqueue_dma source(%arg3 : memref<32x32xf32, #tpu.memory_space<any>>) target(%arg12 : memref<32x32xf32, #tpu.memory_space<vmem>>) target_semaphore(%407 : memref<!tpu.dma_semaphore, #tpu.memory_space<semaphore_mem>>)
      %c1_i32_139 = arith.constant 1 : i32
      %408 = tpu.memref_slice %arg14[%c1_i32_139] : memref<2x!tpu.dma_semaphore, #tpu.memory_space<semaphore_mem>> -> memref<1x!tpu.dma_semaphore, #tpu.memory_space<semaphore_mem>>
      %409 = tpu.memref_squeeze %408 : memref<1x!tpu.dma_semaphore, #tpu.memory_space<semaphore_mem>> -> memref<!tpu.dma_semaphore, #tpu.memory_space<semaphore_mem>>
      tpu.enqueue_dma source(%arg4 : memref<32x32xf32, #tpu.memory_space<any>>) target(%arg13 : memref<32x32xf32, #tpu.memory_space<vmem>>) target_semaphore(%409 : memref<!tpu.dma_semaphore, #tpu.memory_space<semaphore_mem>>)
    } else {
    }
    %c0 = arith.constant 0 : index
    %c0_3 = arith.constant 0 : index
    %8 = vector.load %arg5[%c0, %c0_3] : memref<8x192xf32, #tpu.memory_space<vmem>>, vector<8x32xf32>
    %c0_4 = arith.constant 0 : index
    %c32 = arith.constant 32 : index
    %9 = vector.load %arg5[%c0_4, %c32] : memref<8x192xf32, #tpu.memory_space<vmem>>, vector<8x32xf32>
    %10 = arith.addf %8, %9 : vector<8x32xf32>
    %c0_5 = arith.constant 0 : index
    %c64 = arith.constant 64 : index
    %11 = vector.load %arg5[%c0_5, %c64] : memref<8x192xf32, #tpu.memory_space<vmem>>, vector<8x32xf32>
    %12 = arith.addf %10, %11 : vector<8x32xf32>
    %c0_6 = arith.constant 0 : index
    %c96 = arith.constant 96 : index
    %13 = vector.load %arg5[%c0_6, %c96] : memref<8x192xf32, #tpu.memory_space<vmem>>, vector<8x32xf32>
    %14 = arith.addf %12, %13 : vector<8x32xf32>
    %c0_7 = arith.constant 0 : index
    %c128 = arith.constant 128 : index
    %15 = vector.load %arg5[%c0_7, %c128] : memref<8x192xf32, #tpu.memory_space<vmem>>, vector<8x32xf32>
    %16 = arith.addf %14, %15 : vector<8x32xf32>
    %c0_8 = arith.constant 0 : index
    %c160 = arith.constant 160 : index
    %17 = vector.load %arg5[%c0_8, %c160] : memref<8x192xf32, #tpu.memory_space<vmem>>, vector<8x32xf32>
    %18 = arith.addf %16, %17 : vector<8x32xf32>
    %cst = arith.constant 0.166666672 : f32
    %19 = vector.broadcast %cst : f32 to vector<8x32xf32>
    %20 = arith.mulf %18, %19 : vector<8x32xf32>
    %21 = arith.mulf %20, %20 : vector<8x32xf32>
    %cst_9 = arith.constant dense<0.000000e+00> : vector<8xf32>
    %22 = vector.multi_reduction <add>, %21, %cst_9 [1] : vector<8x32xf32> to vector<8xf32>
    %23 = vector.shape_cast %22 : vector<8xf32> to vector<8x1xf32>
    %cst_10 = arith.constant 1.000000e-24 : f32
    %24 = vector.broadcast %cst_10 : f32 to vector<8x1xf32>
    %25 = arith.maximumf %23, %24 : vector<8x1xf32>
    %26 = math.rsqrt %25 : vector<8x1xf32>
    %27 = vector.broadcast %26 : vector<8x1xf32> to vector<8x32xf32>
    %28 = arith.mulf %20, %27 : vector<8x32xf32>
    %c0_11 = arith.constant 0 : index
    %c0_12 = arith.constant 0 : index
    %29 = vector.load %arg6[%c0_11, %c0_12] : memref<8x192xf32, #tpu.memory_space<vmem>>, vector<8x32xf32>
    %c0_13 = arith.constant 0 : index
    %c32_14 = arith.constant 32 : index
    %30 = vector.load %arg6[%c0_13, %c32_14] : memref<8x192xf32, #tpu.memory_space<vmem>>, vector<8x32xf32>
    %31 = arith.addf %29, %30 : vector<8x32xf32>
    %c0_15 = arith.constant 0 : index
    %c64_16 = arith.constant 64 : index
    %32 = vector.load %arg6[%c0_15, %c64_16] : memref<8x192xf32, #tpu.memory_space<vmem>>, vector<8x32xf32>
    %33 = arith.addf %31, %32 : vector<8x32xf32>
    %c0_17 = arith.constant 0 : index
    %c96_18 = arith.constant 96 : index
    %34 = vector.load %arg6[%c0_17, %c96_18] : memref<8x192xf32, #tpu.memory_space<vmem>>, vector<8x32xf32>
    %35 = arith.addf %33, %34 : vector<8x32xf32>
    %c0_19 = arith.constant 0 : index
    %c128_20 = arith.constant 128 : index
    %36 = vector.load %arg6[%c0_19, %c128_20] : memref<8x192xf32, #tpu.memory_space<vmem>>, vector<8x32xf32>
    %37 = arith.addf %35, %36 : vector<8x32xf32>
    %c0_21 = arith.constant 0 : index
    %c160_22 = arith.constant 160 : index
    %38 = vector.load %arg6[%c0_21, %c160_22] : memref<8x192xf32, #tpu.memory_space<vmem>>, vector<8x32xf32>
    %39 = arith.addf %37, %38 : vector<8x32xf32>
    %cst_23 = arith.constant 0.166666672 : f32
    %40 = vector.broadcast %cst_23 : f32 to vector<8x32xf32>
    %41 = arith.mulf %39, %40 : vector<8x32xf32>
    %42 = arith.mulf %41, %41 : vector<8x32xf32>
    %cst_24 = arith.constant dense<0.000000e+00> : vector<8xf32>
    %43 = vector.multi_reduction <add>, %42, %cst_24 [1] : vector<8x32xf32> to vector<8xf32>
    %44 = vector.shape_cast %43 : vector<8xf32> to vector<8x1xf32>
    %cst_25 = arith.constant 1.000000e-24 : f32
    %45 = vector.broadcast %cst_25 : f32 to vector<8x1xf32>
    %46 = arith.maximumf %44, %45 : vector<8x1xf32>
    %47 = math.rsqrt %46 : vector<8x1xf32>
    %48 = vector.broadcast %47 : vector<8x1xf32> to vector<8x32xf32>
    %49 = arith.mulf %41, %48 : vector<8x32xf32>
    %50 = arith.mulf %28, %49 : vector<8x32xf32>
    %cst_26 = arith.constant dense<0.000000e+00> : vector<8xf32>
    %51 = vector.multi_reduction <add>, %50, %cst_26 [1] : vector<8x32xf32> to vector<8xf32>
    %52 = vector.shape_cast %51 : vector<8xf32> to vector<8x1xf32>
    %cst_27 = arith.constant 14.2857141 : f32
    %53 = vector.broadcast %cst_27 : f32 to vector<8x1xf32>
    %54 = arith.mulf %52, %53 : vector<8x1xf32>
    %cst_28 = arith.constant 1.000000e+00 : f32
    %55 = vector.broadcast %cst_28 : f32 to vector<8x1xf32>
    %c0_29 = arith.constant 0 : index
    %c0_30 = arith.constant 0 : index
    %56 = vector.load %arg7[%c0_29, %c0_30] : memref<8x256xf32, #tpu.memory_space<vmem>>, vector<8x32xf32>
    %57 = arith.mulf %28, %56 : vector<8x32xf32>
    %cst_31 = arith.constant dense<0.000000e+00> : vector<8xf32>
    %58 = vector.multi_reduction <add>, %57, %cst_31 [1] : vector<8x32xf32> to vector<8xf32>
    %59 = vector.shape_cast %58 : vector<8xf32> to vector<8x1xf32>
    %60 = arith.mulf %56, %56 : vector<8x32xf32>
    %cst_32 = arith.constant dense<0.000000e+00> : vector<8xf32>
    %61 = vector.multi_reduction <add>, %60, %cst_32 [1] : vector<8x32xf32> to vector<8xf32>
    %62 = vector.shape_cast %61 : vector<8xf32> to vector<8x1xf32>
    %cst_33 = arith.constant 1.000000e-24 : f32
    %63 = vector.broadcast %cst_33 : f32 to vector<8x1xf32>
    %64 = arith.maximumf %62, %63 : vector<8x1xf32>
    %65 = math.rsqrt %64 : vector<8x1xf32>
    %66 = arith.mulf %59, %65 : vector<8x1xf32>
    %cst_34 = arith.constant 14.2857141 : f32
    %67 = vector.broadcast %cst_34 : f32 to vector<8x1xf32>
    %68 = arith.mulf %66, %67 : vector<8x1xf32>
    %69 = arith.maximumf %54, %68 : vector<8x1xf32>
    %70 = arith.subf %54, %69 : vector<8x1xf32>
    %71 = math.exp %70 : vector<8x1xf32>
    %72 = arith.mulf %55, %71 : vector<8x1xf32>
    %73 = arith.subf %68, %69 : vector<8x1xf32>
    %74 = math.exp %73 : vector<8x1xf32>
    %75 = arith.addf %72, %74 : vector<8x1xf32>
    %c0_35 = arith.constant 0 : index
    %c32_36 = arith.constant 32 : index
    %76 = vector.load %arg7[%c0_35, %c32_36] : memref<8x256xf32, #tpu.memory_space<vmem>>, vector<8x32xf32>
    %77 = arith.mulf %28, %76 : vector<8x32xf32>
    %cst_37 = arith.constant dense<0.000000e+00> : vector<8xf32>
    %78 = vector.multi_reduction <add>, %77, %cst_37 [1] : vector<8x32xf32> to vector<8xf32>
    %79 = vector.shape_cast %78 : vector<8xf32> to vector<8x1xf32>
    %80 = arith.mulf %76, %76 : vector<8x32xf32>
    %cst_38 = arith.constant dense<0.000000e+00> : vector<8xf32>
    %81 = vector.multi_reduction <add>, %80, %cst_38 [1] : vector<8x32xf32> to vector<8xf32>
    %82 = vector.shape_cast %81 : vector<8xf32> to vector<8x1xf32>
    %cst_39 = arith.constant 1.000000e-24 : f32
    %83 = vector.broadcast %cst_39 : f32 to vector<8x1xf32>
    %84 = arith.maximumf %82, %83 : vector<8x1xf32>
    %85 = math.rsqrt %84 : vector<8x1xf32>
    %86 = arith.mulf %79, %85 : vector<8x1xf32>
    %cst_40 = arith.constant 14.2857141 : f32
    %87 = vector.broadcast %cst_40 : f32 to vector<8x1xf32>
    %88 = arith.mulf %86, %87 : vector<8x1xf32>
    %89 = arith.maximumf %69, %88 : vector<8x1xf32>
    %90 = arith.subf %69, %89 : vector<8x1xf32>
    %91 = math.exp %90 : vector<8x1xf32>
    %92 = arith.mulf %75, %91 : vector<8x1xf32>
    %93 = arith.subf %88, %89 : vector<8x1xf32>
    %94 = math.exp %93 : vector<8x1xf32>
    %95 = arith.addf %92, %94 : vector<8x1xf32>
    %c0_41 = arith.constant 0 : index
    %c64_42 = arith.constant 64 : index
    %96 = vector.load %arg7[%c0_41, %c64_42] : memref<8x256xf32, #tpu.memory_space<vmem>>, vector<8x32xf32>
    %97 = arith.mulf %28, %96 : vector<8x32xf32>
    %cst_43 = arith.constant dense<0.000000e+00> : vector<8xf32>
    %98 = vector.multi_reduction <add>, %97, %cst_43 [1] : vector<8x32xf32> to vector<8xf32>
    %99 = vector.shape_cast %98 : vector<8xf32> to vector<8x1xf32>
    %100 = arith.mulf %96, %96 : vector<8x32xf32>
    %cst_44 = arith.constant dense<0.000000e+00> : vector<8xf32>
    %101 = vector.multi_reduction <add>, %100, %cst_44 [1] : vector<8x32xf32> to vector<8xf32>
    %102 = vector.shape_cast %101 : vector<8xf32> to vector<8x1xf32>
    %cst_45 = arith.constant 1.000000e-24 : f32
    %103 = vector.broadcast %cst_45 : f32 to vector<8x1xf32>
    %104 = arith.maximumf %102, %103 : vector<8x1xf32>
    %105 = math.rsqrt %104 : vector<8x1xf32>
    %106 = arith.mulf %99, %105 : vector<8x1xf32>
    %cst_46 = arith.constant 14.2857141 : f32
    %107 = vector.broadcast %cst_46 : f32 to vector<8x1xf32>
    %108 = arith.mulf %106, %107 : vector<8x1xf32>
    %109 = arith.maximumf %89, %108 : vector<8x1xf32>
    %110 = arith.subf %89, %109 : vector<8x1xf32>
    %111 = math.exp %110 : vector<8x1xf32>
    %112 = arith.mulf %95, %111 : vector<8x1xf32>
    %113 = arith.subf %108, %109 : vector<8x1xf32>
    %114 = math.exp %113 : vector<8x1xf32>
    %115 = arith.addf %112, %114 : vector<8x1xf32>
    %c0_47 = arith.constant 0 : index
    %c96_48 = arith.constant 96 : index
    %116 = vector.load %arg7[%c0_47, %c96_48] : memref<8x256xf32, #tpu.memory_space<vmem>>, vector<8x32xf32>
    %117 = arith.mulf %28, %116 : vector<8x32xf32>
    %cst_49 = arith.constant dense<0.000000e+00> : vector<8xf32>
    %118 = vector.multi_reduction <add>, %117, %cst_49 [1] : vector<8x32xf32> to vector<8xf32>
    %119 = vector.shape_cast %118 : vector<8xf32> to vector<8x1xf32>
    %120 = arith.mulf %116, %116 : vector<8x32xf32>
    %cst_50 = arith.constant dense<0.000000e+00> : vector<8xf32>
    %121 = vector.multi_reduction <add>, %120, %cst_50 [1] : vector<8x32xf32> to vector<8xf32>
    %122 = vector.shape_cast %121 : vector<8xf32> to vector<8x1xf32>
    %cst_51 = arith.constant 1.000000e-24 : f32
    %123 = vector.broadcast %cst_51 : f32 to vector<8x1xf32>
    %124 = arith.maximumf %122, %123 : vector<8x1xf32>
    %125 = math.rsqrt %124 : vector<8x1xf32>
    %126 = arith.mulf %119, %125 : vector<8x1xf32>
    %cst_52 = arith.constant 14.2857141 : f32
    %127 = vector.broadcast %cst_52 : f32 to vector<8x1xf32>
    %128 = arith.mulf %126, %127 : vector<8x1xf32>
    %129 = arith.maximumf %109, %128 : vector<8x1xf32>
    %130 = arith.subf %109, %129 : vector<8x1xf32>
    %131 = math.exp %130 : vector<8x1xf32>
    %132 = arith.mulf %115, %131 : vector<8x1xf32>
    %133 = arith.subf %128, %129 : vector<8x1xf32>
    %134 = math.exp %133 : vector<8x1xf32>
    %135 = arith.addf %132, %134 : vector<8x1xf32>
    %c0_53 = arith.constant 0 : index
    %c128_54 = arith.constant 128 : index
    %136 = vector.load %arg7[%c0_53, %c128_54] : memref<8x256xf32, #tpu.memory_space<vmem>>, vector<8x32xf32>
    %137 = arith.mulf %28, %136 : vector<8x32xf32>
    %cst_55 = arith.constant dense<0.000000e+00> : vector<8xf32>
    %138 = vector.multi_reduction <add>, %137, %cst_55 [1] : vector<8x32xf32> to vector<8xf32>
    %139 = vector.shape_cast %138 : vector<8xf32> to vector<8x1xf32>
    %140 = arith.mulf %136, %136 : vector<8x32xf32>
    %cst_56 = arith.constant dense<0.000000e+00> : vector<8xf32>
    %141 = vector.multi_reduction <add>, %140, %cst_56 [1] : vector<8x32xf32> to vector<8xf32>
    %142 = vector.shape_cast %141 : vector<8xf32> to vector<8x1xf32>
    %cst_57 = arith.constant 1.000000e-24 : f32
    %143 = vector.broadcast %cst_57 : f32 to vector<8x1xf32>
    %144 = arith.maximumf %142, %143 : vector<8x1xf32>
    %145 = math.rsqrt %144 : vector<8x1xf32>
    %146 = arith.mulf %139, %145 : vector<8x1xf32>
    %cst_58 = arith.constant 14.2857141 : f32
    %147 = vector.broadcast %cst_58 : f32 to vector<8x1xf32>
    %148 = arith.mulf %146, %147 : vector<8x1xf32>
    %149 = arith.maximumf %129, %148 : vector<8x1xf32>
    %150 = arith.subf %129, %149 : vector<8x1xf32>
    %151 = math.exp %150 : vector<8x1xf32>
    %152 = arith.mulf %135, %151 : vector<8x1xf32>
    %153 = arith.subf %148, %149 : vector<8x1xf32>
    %154 = math.exp %153 : vector<8x1xf32>
    %155 = arith.addf %152, %154 : vector<8x1xf32>
    %c0_59 = arith.constant 0 : index
    %c160_60 = arith.constant 160 : index
    %156 = vector.load %arg7[%c0_59, %c160_60] : memref<8x256xf32, #tpu.memory_space<vmem>>, vector<8x32xf32>
    %157 = arith.mulf %28, %156 : vector<8x32xf32>
    %cst_61 = arith.constant dense<0.000000e+00> : vector<8xf32>
    %158 = vector.multi_reduction <add>, %157, %cst_61 [1] : vector<8x32xf32> to vector<8xf32>
    %159 = vector.shape_cast %158 : vector<8xf32> to vector<8x1xf32>
    %160 = arith.mulf %156, %156 : vector<8x32xf32>
    %cst_62 = arith.constant dense<0.000000e+00> : vector<8xf32>
    %161 = vector.multi_reduction <add>, %160, %cst_62 [1] : vector<8x32xf32> to vector<8xf32>
    %162 = vector.shape_cast %161 : vector<8xf32> to vector<8x1xf32>
    %cst_63 = arith.constant 1.000000e-24 : f32
    %163 = vector.broadcast %cst_63 : f32 to vector<8x1xf32>
    %164 = arith.maximumf %162, %163 : vector<8x1xf32>
    %165 = math.rsqrt %164 : vector<8x1xf32>
    %166 = arith.mulf %159, %165 : vector<8x1xf32>
    %cst_64 = arith.constant 14.2857141 : f32
    %167 = vector.broadcast %cst_64 : f32 to vector<8x1xf32>
    %168 = arith.mulf %166, %167 : vector<8x1xf32>
    %169 = arith.maximumf %149, %168 : vector<8x1xf32>
    %170 = arith.subf %149, %169 : vector<8x1xf32>
    %171 = math.exp %170 : vector<8x1xf32>
    %172 = arith.mulf %155, %171 : vector<8x1xf32>
    %173 = arith.subf %168, %169 : vector<8x1xf32>
    %174 = math.exp %173 : vector<8x1xf32>
    %175 = arith.addf %172, %174 : vector<8x1xf32>
    %c0_65 = arith.constant 0 : index
    %c192 = arith.constant 192 : index
    %176 = vector.load %arg7[%c0_65, %c192] : memref<8x256xf32, #tpu.memory_space<vmem>>, vector<8x32xf32>
    %177 = arith.mulf %28, %176 : vector<8x32xf32>
    %cst_66 = arith.constant dense<0.000000e+00> : vector<8xf32>
    %178 = vector.multi_reduction <add>, %177, %cst_66 [1] : vector<8x32xf32> to vector<8xf32>
    %179 = vector.shape_cast %178 : vector<8xf32> to vector<8x1xf32>
    %180 = arith.mulf %176, %176 : vector<8x32xf32>
    %cst_67 = arith.constant dense<0.000000e+00> : vector<8xf32>
    %181 = vector.multi_reduction <add>, %180, %cst_67 [1] : vector<8x32xf32> to vector<8xf32>
    %182 = vector.shape_cast %181 : vector<8xf32> to vector<8x1xf32>
    %cst_68 = arith.constant 1.000000e-24 : f32
    %183 = vector.broadcast %cst_68 : f32 to vector<8x1xf32>
    %184 = arith.maximumf %182, %183 : vector<8x1xf32>
    %185 = math.rsqrt %184 : vector<8x1xf32>
    %186 = arith.mulf %179, %185 : vector<8x1xf32>
    %cst_69 = arith.constant 14.2857141 : f32
    %187 = vector.broadcast %cst_69 : f32 to vector<8x1xf32>
    %188 = arith.mulf %186, %187 : vector<8x1xf32>
    %189 = arith.maximumf %169, %188 : vector<8x1xf32>
    %190 = arith.subf %169, %189 : vector<8x1xf32>
    %191 = math.exp %190 : vector<8x1xf32>
    %192 = arith.mulf %175, %191 : vector<8x1xf32>
    %193 = arith.subf %188, %189 : vector<8x1xf32>
    %194 = math.exp %193 : vector<8x1xf32>
    %195 = arith.addf %192, %194 : vector<8x1xf32>
    %c0_70 = arith.constant 0 : index
    %c224 = arith.constant 224 : index
    %196 = vector.load %arg7[%c0_70, %c224] : memref<8x256xf32, #tpu.memory_space<vmem>>, vector<8x32xf32>
    %197 = arith.mulf %28, %196 : vector<8x32xf32>
    %cst_71 = arith.constant dense<0.000000e+00> : vector<8xf32>
    %198 = vector.multi_reduction <add>, %197, %cst_71 [1] : vector<8x32xf32> to vector<8xf32>
    %199 = vector.shape_cast %198 : vector<8xf32> to vector<8x1xf32>
    %200 = arith.mulf %196, %196 : vector<8x32xf32>
    %cst_72 = arith.constant dense<0.000000e+00> : vector<8xf32>
    %201 = vector.multi_reduction <add>, %200, %cst_72 [1] : vector<8x32xf32> to vector<8xf32>
    %202 = vector.shape_cast %201 : vector<8xf32> to vector<8x1xf32>
    %cst_73 = arith.constant 1.000000e-24 : f32
    %203 = vector.broadcast %cst_73 : f32 to vector<8x1xf32>
    %204 = arith.maximumf %202, %203 : vector<8x1xf32>
    %205 = math.rsqrt %204 : vector<8x1xf32>
    %206 = arith.mulf %199, %205 : vector<8x1xf32>
    %cst_74 = arith.constant 14.2857141 : f32
    %207 = vector.broadcast %cst_74 : f32 to vector<8x1xf32>
    %208 = arith.mulf %206, %207 : vector<8x1xf32>
    %209 = arith.maximumf %189, %208 : vector<8x1xf32>
    %210 = arith.subf %189, %209 : vector<8x1xf32>
    %211 = math.exp %210 : vector<8x1xf32>
    %212 = arith.mulf %195, %211 : vector<8x1xf32>
    %213 = arith.subf %208, %209 : vector<8x1xf32>
    %214 = math.exp %213 : vector<8x1xf32>
    %215 = arith.addf %212, %214 : vector<8x1xf32>
    %216 = math.log %215 : vector<8x1xf32>
    %217 = arith.addf %209, %216 : vector<8x1xf32>
    %218 = arith.subf %217, %54 : vector<8x1xf32>
    %219 = arith.mulf %49, %28 : vector<8x32xf32>
    %cst_75 = arith.constant dense<0.000000e+00> : vector<8xf32>
    %220 = vector.multi_reduction <add>, %219, %cst_75 [1] : vector<8x32xf32> to vector<8xf32>
    %221 = vector.shape_cast %220 : vector<8xf32> to vector<8x1xf32>
    %cst_76 = arith.constant 14.2857141 : f32
    %222 = vector.broadcast %cst_76 : f32 to vector<8x1xf32>
    %223 = arith.mulf %221, %222 : vector<8x1xf32>
    %cst_77 = arith.constant 1.000000e+00 : f32
    %224 = vector.broadcast %cst_77 : f32 to vector<8x1xf32>
    %c0_78 = arith.constant 0 : index
    %c0_79 = arith.constant 0 : index
    %225 = vector.load %arg8[%c0_78, %c0_79] : memref<8x256xf32, #tpu.memory_space<vmem>>, vector<8x32xf32>
    %226 = arith.mulf %49, %225 : vector<8x32xf32>
    %cst_80 = arith.constant dense<0.000000e+00> : vector<8xf32>
    %227 = vector.multi_reduction <add>, %226, %cst_80 [1] : vector<8x32xf32> to vector<8xf32>
    %228 = vector.shape_cast %227 : vector<8xf32> to vector<8x1xf32>
    %229 = arith.mulf %225, %225 : vector<8x32xf32>
    %cst_81 = arith.constant dense<0.000000e+00> : vector<8xf32>
    %230 = vector.multi_reduction <add>, %229, %cst_81 [1] : vector<8x32xf32> to vector<8xf32>
    %231 = vector.shape_cast %230 : vector<8xf32> to vector<8x1xf32>
    %cst_82 = arith.constant 1.000000e-24 : f32
    %232 = vector.broadcast %cst_82 : f32 to vector<8x1xf32>
    %233 = arith.maximumf %231, %232 : vector<8x1xf32>
    %234 = math.rsqrt %233 : vector<8x1xf32>
    %235 = arith.mulf %228, %234 : vector<8x1xf32>
    %cst_83 = arith.constant 14.2857141 : f32
    %236 = vector.broadcast %cst_83 : f32 to vector<8x1xf32>
    %237 = arith.mulf %235, %236 : vector<8x1xf32>
    %238 = arith.maximumf %223, %237 : vector<8x1xf32>
    %239 = arith.subf %223, %238 : vector<8x1xf32>
    %240 = math.exp %239 : vector<8x1xf32>
    %241 = arith.mulf %224, %240 : vector<8x1xf32>
    %242 = arith.subf %237, %238 : vector<8x1xf32>
    %243 = math.exp %242 : vector<8x1xf32>
    %244 = arith.addf %241, %243 : vector<8x1xf32>
    %c0_84 = arith.constant 0 : index
    %c32_85 = arith.constant 32 : index
    %245 = vector.load %arg8[%c0_84, %c32_85] : memref<8x256xf32, #tpu.memory_space<vmem>>, vector<8x32xf32>
    %246 = arith.mulf %49, %245 : vector<8x32xf32>
    %cst_86 = arith.constant dense<0.000000e+00> : vector<8xf32>
    %247 = vector.multi_reduction <add>, %246, %cst_86 [1] : vector<8x32xf32> to vector<8xf32>
    %248 = vector.shape_cast %247 : vector<8xf32> to vector<8x1xf32>
    %249 = arith.mulf %245, %245 : vector<8x32xf32>
    %cst_87 = arith.constant dense<0.000000e+00> : vector<8xf32>
    %250 = vector.multi_reduction <add>, %249, %cst_87 [1] : vector<8x32xf32> to vector<8xf32>
    %251 = vector.shape_cast %250 : vector<8xf32> to vector<8x1xf32>
    %cst_88 = arith.constant 1.000000e-24 : f32
    %252 = vector.broadcast %cst_88 : f32 to vector<8x1xf32>
    %253 = arith.maximumf %251, %252 : vector<8x1xf32>
    %254 = math.rsqrt %253 : vector<8x1xf32>
    %255 = arith.mulf %248, %254 : vector<8x1xf32>
    %cst_89 = arith.constant 14.2857141 : f32
    %256 = vector.broadcast %cst_89 : f32 to vector<8x1xf32>
    %257 = arith.mulf %255, %256 : vector<8x1xf32>
    %258 = arith.maximumf %238, %257 : vector<8x1xf32>
    %259 = arith.subf %238, %258 : vector<8x1xf32>
    %260 = math.exp %259 : vector<8x1xf32>
    %261 = arith.mulf %244, %260 : vector<8x1xf32>
    %262 = arith.subf %257, %258 : vector<8x1xf32>
    %263 = math.exp %262 : vector<8x1xf32>
    %264 = arith.addf %261, %263 : vector<8x1xf32>
    %c0_90 = arith.constant 0 : index
    %c64_91 = arith.constant 64 : index
    %265 = vector.load %arg8[%c0_90, %c64_91] : memref<8x256xf32, #tpu.memory_space<vmem>>, vector<8x32xf32>
    %266 = arith.mulf %49, %265 : vector<8x32xf32>
    %cst_92 = arith.constant dense<0.000000e+00> : vector<8xf32>
    %267 = vector.multi_reduction <add>, %266, %cst_92 [1] : vector<8x32xf32> to vector<8xf32>
    %268 = vector.shape_cast %267 : vector<8xf32> to vector<8x1xf32>
    %269 = arith.mulf %265, %265 : vector<8x32xf32>
    %cst_93 = arith.constant dense<0.000000e+00> : vector<8xf32>
    %270 = vector.multi_reduction <add>, %269, %cst_93 [1] : vector<8x32xf32> to vector<8xf32>
    %271 = vector.shape_cast %270 : vector<8xf32> to vector<8x1xf32>
    %cst_94 = arith.constant 1.000000e-24 : f32
    %272 = vector.broadcast %cst_94 : f32 to vector<8x1xf32>
    %273 = arith.maximumf %271, %272 : vector<8x1xf32>
    %274 = math.rsqrt %273 : vector<8x1xf32>
    %275 = arith.mulf %268, %274 : vector<8x1xf32>
    %cst_95 = arith.constant 14.2857141 : f32
    %276 = vector.broadcast %cst_95 : f32 to vector<8x1xf32>
    %277 = arith.mulf %275, %276 : vector<8x1xf32>
    %278 = arith.maximumf %258, %277 : vector<8x1xf32>
    %279 = arith.subf %258, %278 : vector<8x1xf32>
    %280 = math.exp %279 : vector<8x1xf32>
    %281 = arith.mulf %264, %280 : vector<8x1xf32>
    %282 = arith.subf %277, %278 : vector<8x1xf32>
    %283 = math.exp %282 : vector<8x1xf32>
    %284 = arith.addf %281, %283 : vector<8x1xf32>
    %c0_96 = arith.constant 0 : index
    %c96_97 = arith.constant 96 : index
    %285 = vector.load %arg8[%c0_96, %c96_97] : memref<8x256xf32, #tpu.memory_space<vmem>>, vector<8x32xf32>
    %286 = arith.mulf %49, %285 : vector<8x32xf32>
    %cst_98 = arith.constant dense<0.000000e+00> : vector<8xf32>
    %287 = vector.multi_reduction <add>, %286, %cst_98 [1] : vector<8x32xf32> to vector<8xf32>
    %288 = vector.shape_cast %287 : vector<8xf32> to vector<8x1xf32>
    %289 = arith.mulf %285, %285 : vector<8x32xf32>
    %cst_99 = arith.constant dense<0.000000e+00> : vector<8xf32>
    %290 = vector.multi_reduction <add>, %289, %cst_99 [1] : vector<8x32xf32> to vector<8xf32>
    %291 = vector.shape_cast %290 : vector<8xf32> to vector<8x1xf32>
    %cst_100 = arith.constant 1.000000e-24 : f32
    %292 = vector.broadcast %cst_100 : f32 to vector<8x1xf32>
    %293 = arith.maximumf %291, %292 : vector<8x1xf32>
    %294 = math.rsqrt %293 : vector<8x1xf32>
    %295 = arith.mulf %288, %294 : vector<8x1xf32>
    %cst_101 = arith.constant 14.2857141 : f32
    %296 = vector.broadcast %cst_101 : f32 to vector<8x1xf32>
    %297 = arith.mulf %295, %296 : vector<8x1xf32>
    %298 = arith.maximumf %278, %297 : vector<8x1xf32>
    %299 = arith.subf %278, %298 : vector<8x1xf32>
    %300 = math.exp %299 : vector<8x1xf32>
    %301 = arith.mulf %284, %300 : vector<8x1xf32>
    %302 = arith.subf %297, %298 : vector<8x1xf32>
    %303 = math.exp %302 : vector<8x1xf32>
    %304 = arith.addf %301, %303 : vector<8x1xf32>
    %c0_102 = arith.constant 0 : index
    %c128_103 = arith.constant 128 : index
    %305 = vector.load %arg8[%c0_102, %c128_103] : memref<8x256xf32, #tpu.memory_space<vmem>>, vector<8x32xf32>
    %306 = arith.mulf %49, %305 : vector<8x32xf32>
    %cst_104 = arith.constant dense<0.000000e+00> : vector<8xf32>
    %307 = vector.multi_reduction <add>, %306, %cst_104 [1] : vector<8x32xf32> to vector<8xf32>
    %308 = vector.shape_cast %307 : vector<8xf32> to vector<8x1xf32>
    %309 = arith.mulf %305, %305 : vector<8x32xf32>
    %cst_105 = arith.constant dense<0.000000e+00> : vector<8xf32>
    %310 = vector.multi_reduction <add>, %309, %cst_105 [1] : vector<8x32xf32> to vector<8xf32>
    %311 = vector.shape_cast %310 : vector<8xf32> to vector<8x1xf32>
    %cst_106 = arith.constant 1.000000e-24 : f32
    %312 = vector.broadcast %cst_106 : f32 to vector<8x1xf32>
    %313 = arith.maximumf %311, %312 : vector<8x1xf32>
    %314 = math.rsqrt %313 : vector<8x1xf32>
    %315 = arith.mulf %308, %314 : vector<8x1xf32>
    %cst_107 = arith.constant 14.2857141 : f32
    %316 = vector.broadcast %cst_107 : f32 to vector<8x1xf32>
    %317 = arith.mulf %315, %316 : vector<8x1xf32>
    %318 = arith.maximumf %298, %317 : vector<8x1xf32>
    %319 = arith.subf %298, %318 : vector<8x1xf32>
    %320 = math.exp %319 : vector<8x1xf32>
    %321 = arith.mulf %304, %320 : vector<8x1xf32>
    %322 = arith.subf %317, %318 : vector<8x1xf32>
    %323 = math.exp %322 : vector<8x1xf32>
    %324 = arith.addf %321, %323 : vector<8x1xf32>
    %c0_108 = arith.constant 0 : index
    %c160_109 = arith.constant 160 : index
    %325 = vector.load %arg8[%c0_108, %c160_109] : memref<8x256xf32, #tpu.memory_space<vmem>>, vector<8x32xf32>
    %326 = arith.mulf %49, %325 : vector<8x32xf32>
    %cst_110 = arith.constant dense<0.000000e+00> : vector<8xf32>
    %327 = vector.multi_reduction <add>, %326, %cst_110 [1] : vector<8x32xf32> to vector<8xf32>
    %328 = vector.shape_cast %327 : vector<8xf32> to vector<8x1xf32>
    %329 = arith.mulf %325, %325 : vector<8x32xf32>
    %cst_111 = arith.constant dense<0.000000e+00> : vector<8xf32>
    %330 = vector.multi_reduction <add>, %329, %cst_111 [1] : vector<8x32xf32> to vector<8xf32>
    %331 = vector.shape_cast %330 : vector<8xf32> to vector<8x1xf32>
    %cst_112 = arith.constant 1.000000e-24 : f32
    %332 = vector.broadcast %cst_112 : f32 to vector<8x1xf32>
    %333 = arith.maximumf %331, %332 : vector<8x1xf32>
    %334 = math.rsqrt %333 : vector<8x1xf32>
    %335 = arith.mulf %328, %334 : vector<8x1xf32>
    %cst_113 = arith.constant 14.2857141 : f32
    %336 = vector.broadcast %cst_113 : f32 to vector<8x1xf32>
    %337 = arith.mulf %335, %336 : vector<8x1xf32>
    %338 = arith.maximumf %318, %337 : vector<8x1xf32>
    %339 = arith.subf %318, %338 : vector<8x1xf32>
    %340 = math.exp %339 : vector<8x1xf32>
    %341 = arith.mulf %324, %340 : vector<8x1xf32>
    %342 = arith.subf %337, %338 : vector<8x1xf32>
    %343 = math.exp %342 : vector<8x1xf32>
    %344 = arith.addf %341, %343 : vector<8x1xf32>
    %c0_114 = arith.constant 0 : index
    %c192_115 = arith.constant 192 : index
    %345 = vector.load %arg8[%c0_114, %c192_115] : memref<8x256xf32, #tpu.memory_space<vmem>>, vector<8x32xf32>
    %346 = arith.mulf %49, %345 : vector<8x32xf32>
    %cst_116 = arith.constant dense<0.000000e+00> : vector<8xf32>
    %347 = vector.multi_reduction <add>, %346, %cst_116 [1] : vector<8x32xf32> to vector<8xf32>
    %348 = vector.shape_cast %347 : vector<8xf32> to vector<8x1xf32>
    %349 = arith.mulf %345, %345 : vector<8x32xf32>
    %cst_117 = arith.constant dense<0.000000e+00> : vector<8xf32>
    %350 = vector.multi_reduction <add>, %349, %cst_117 [1] : vector<8x32xf32> to vector<8xf32>
    %351 = vector.shape_cast %350 : vector<8xf32> to vector<8x1xf32>
    %cst_118 = arith.constant 1.000000e-24 : f32
    %352 = vector.broadcast %cst_118 : f32 to vector<8x1xf32>
    %353 = arith.maximumf %351, %352 : vector<8x1xf32>
    %354 = math.rsqrt %353 : vector<8x1xf32>
    %355 = arith.mulf %348, %354 : vector<8x1xf32>
    %cst_119 = arith.constant 14.2857141 : f32
    %356 = vector.broadcast %cst_119 : f32 to vector<8x1xf32>
    %357 = arith.mulf %355, %356 : vector<8x1xf32>
    %358 = arith.maximumf %338, %357 : vector<8x1xf32>
    %359 = arith.subf %338, %358 : vector<8x1xf32>
    %360 = math.exp %359 : vector<8x1xf32>
    %361 = arith.mulf %344, %360 : vector<8x1xf32>
    %362 = arith.subf %357, %358 : vector<8x1xf32>
    %363 = math.exp %362 : vector<8x1xf32>
    %364 = arith.addf %361, %363 : vector<8x1xf32>
    %c0_120 = arith.constant 0 : index
    %c224_121 = arith.constant 224 : index
    %365 = vector.load %arg8[%c0_120, %c224_121] : memref<8x256xf32, #tpu.memory_space<vmem>>, vector<8x32xf32>
    %366 = arith.mulf %49, %365 : vector<8x32xf32>
    %cst_122 = arith.constant dense<0.000000e+00> : vector<8xf32>
    %367 = vector.multi_reduction <add>, %366, %cst_122 [1] : vector<8x32xf32> to vector<8xf32>
    %368 = vector.shape_cast %367 : vector<8xf32> to vector<8x1xf32>
    %369 = arith.mulf %365, %365 : vector<8x32xf32>
    %cst_123 = arith.constant dense<0.000000e+00> : vector<8xf32>
    %370 = vector.multi_reduction <add>, %369, %cst_123 [1] : vector<8x32xf32> to vector<8xf32>
    %371 = vector.shape_cast %370 : vector<8xf32> to vector<8x1xf32>
    %cst_124 = arith.constant 1.000000e-24 : f32
    %372 = vector.broadcast %cst_124 : f32 to vector<8x1xf32>
    %373 = arith.maximumf %371, %372 : vector<8x1xf32>
    %374 = math.rsqrt %373 : vector<8x1xf32>
    %375 = arith.mulf %368, %374 : vector<8x1xf32>
    %cst_125 = arith.constant 14.2857141 : f32
    %376 = vector.broadcast %cst_125 : f32 to vector<8x1xf32>
    %377 = arith.mulf %375, %376 : vector<8x1xf32>
    %378 = arith.maximumf %358, %377 : vector<8x1xf32>
    %379 = arith.subf %358, %378 : vector<8x1xf32>
    %380 = math.exp %379 : vector<8x1xf32>
    %381 = arith.mulf %364, %380 : vector<8x1xf32>
    %382 = arith.subf %377, %378 : vector<8x1xf32>
    %383 = math.exp %382 : vector<8x1xf32>
    %384 = arith.addf %381, %383 : vector<8x1xf32>
    %385 = math.log %384 : vector<8x1xf32>
    %386 = arith.addf %378, %385 : vector<8x1xf32>
    %387 = arith.subf %386, %223 : vector<8x1xf32>
    %388 = arith.addf %218, %387 : vector<8x1xf32>
    %cst_126 = arith.constant 5.000000e-01 : f32
    %389 = vector.broadcast %cst_126 : f32 to vector<8x1xf32>
    %390 = arith.mulf %389, %388 : vector<8x1xf32>
    %c0_127 = arith.constant 0 : index
    %c0_128 = arith.constant 0 : index
    %391 = vector.load %arg11[%c0_127, %c0_128] : memref<1x1xf32, #tpu.memory_space<vmem>>, vector<1x1xf32>
    %cst_129 = arith.constant dense<0.000000e+00> : vector<1xf32>
    %392 = vector.multi_reduction <add>, %390, %cst_129 [0] : vector<8x1xf32> to vector<1xf32>
    %393 = vector.shape_cast %392 : vector<1xf32> to vector<1x1xf32>
    %394 = arith.addf %391, %393 : vector<1x1xf32>
    %c0_130 = arith.constant 0 : index
    %c0_131 = arith.constant 0 : index
    %395 = vector.load %arg11[%c0_130, %c0_131] : memref<1x1xf32, #tpu.memory_space<vmem>>, vector<1x1xf32>
    tpu.vector_store %arg11[%c0_130, %c0_131], %394 {strides = array<i32>} : memref<1x1xf32, #tpu.memory_space<vmem>>, vector<1x1xf32>,
    %c1_i32_132 = arith.constant 1 : i32
    %396 = arith.cmpi eq, %arg1, %c1_i32_132 : i32
    %397 = arith.extui %396 : i1 to i32
    %c0_i32_133 = arith.constant 0 : i32
    %398 = arith.cmpi ne, %397, %c0_i32_133 : i32
    scf.if %398 {
      %c0_138 = arith.constant 0 : index
      %c0_139 = arith.constant 0 : index
      %406 = vector.load %arg11[%c0_138, %c0_139] : memref<1x1xf32, #tpu.memory_space<vmem>>, vector<1x1xf32>
      %cst_140 = arith.constant 3.125000e-02 : f32
      %407 = vector.broadcast %cst_140 : f32 to vector<1x1xf32>
      %408 = arith.mulf %406, %407 : vector<1x1xf32>
      %409 = vector.shape_cast %408 : vector<1x1xf32> to vector<1x1x1xf32>
      %c0_141 = arith.constant 0 : index
      %c0_142 = arith.constant 0 : index
      %c0_143 = arith.constant 0 : index
      %410 = vector.load %arg10[%c0_141, %c0_142, %c0_143] : memref<1x1x1xf32, #tpu.memory_space<vmem>>, vector<1x1x1xf32>
      tpu.vector_store %arg10[%c0_141, %c0_142, %c0_143], %409 {strides = array<i32>} : memref<1x1x1xf32, #tpu.memory_space<vmem>>, vector<1x1x1xf32>,
    } else {
    }
    %399 = arith.extui %2 : i1 to i32
    %c0_i32_134 = arith.constant 0 : i32
    %400 = arith.cmpi ne, %399, %c0_i32_134 : i32
    scf.if %400 {
      %c0_i32_138 = arith.constant 0 : i32
      %406 = tpu.memref_slice %arg14[%c0_i32_138] : memref<2x!tpu.dma_semaphore, #tpu.memory_space<semaphore_mem>> -> memref<1x!tpu.dma_semaphore, #tpu.memory_space<semaphore_mem>>
      %407 = tpu.memref_squeeze %406 : memref<1x!tpu.dma_semaphore, #tpu.memory_space<semaphore_mem>> -> memref<!tpu.dma_semaphore, #tpu.memory_space<semaphore_mem>>
      tpu.wait_dma2 semaphore(%407 : memref<!tpu.dma_semaphore, #tpu.memory_space<semaphore_mem>>) src(%arg3 : memref<32x32xf32, #tpu.memory_space<any>>) dst(%arg12 : memref<32x32xf32, #tpu.memory_space<vmem>>)
      %c1_i32_139 = arith.constant 1 : i32
      %408 = tpu.memref_slice %arg14[%c1_i32_139] : memref<2x!tpu.dma_semaphore, #tpu.memory_space<semaphore_mem>> -> memref<1x!tpu.dma_semaphore, #tpu.memory_space<semaphore_mem>>
      %409 = tpu.memref_squeeze %408 : memref<1x!tpu.dma_semaphore, #tpu.memory_space<semaphore_mem>> -> memref<!tpu.dma_semaphore, #tpu.memory_space<semaphore_mem>>
      tpu.wait_dma2 semaphore(%409 : memref<!tpu.dma_semaphore, #tpu.memory_space<semaphore_mem>>) src(%arg4 : memref<32x32xf32, #tpu.memory_space<any>>) dst(%arg13 : memref<32x32xf32, #tpu.memory_space<vmem>>)
      %c0_140 = arith.constant 0 : index
      %c0_141 = arith.constant 0 : index
      %410 = vector.load %arg12[%c0_140, %c0_141] : memref<32x32xf32, #tpu.memory_space<vmem>>, vector<32x32xf32>
      %411 = arith.mulf %410, %410 : vector<32x32xf32>
      %cst_142 = arith.constant dense<0.000000e+00> : vector<32xf32>
      %412 = vector.multi_reduction <add>, %411, %cst_142 [1] : vector<32x32xf32> to vector<32xf32>
      %413 = vector.shape_cast %412 : vector<32xf32> to vector<32x1xf32>
      %cst_143 = arith.constant 1.000000e-24 : f32
      %414 = vector.broadcast %cst_143 : f32 to vector<32x1xf32>
      %415 = arith.maximumf %413, %414 : vector<32x1xf32>
      %416 = math.rsqrt %415 : vector<32x1xf32>
      %417 = vector.broadcast %416 : vector<32x1xf32> to vector<32x32xf32>
      %418 = arith.mulf %410, %417 : vector<32x32xf32>
      %c0_144 = arith.constant 0 : index
      %c0_145 = arith.constant 0 : index
      %419 = vector.load %arg13[%c0_144, %c0_145] : memref<32x32xf32, #tpu.memory_space<vmem>>, vector<32x32xf32>
      %420 = arith.mulf %419, %419 : vector<32x32xf32>
      %cst_146 = arith.constant dense<0.000000e+00> : vector<32xf32>
      %421 = vector.multi_reduction <add>, %420, %cst_146 [1] : vector<32x32xf32> to vector<32xf32>
      %422 = vector.shape_cast %421 : vector<32xf32> to vector<32x1xf32>
      %cst_147 = arith.constant 1.000000e-24 : f32
      %423 = vector.broadcast %cst_147 : f32 to vector<32x1xf32>
      %424 = arith.maximumf %422, %423 : vector<32x1xf32>
      %425 = math.rsqrt %424 : vector<32x1xf32>
      %426 = vector.broadcast %425 : vector<32x1xf32> to vector<32x32xf32>
      %427 = arith.mulf %419, %426 : vector<32x32xf32>
      %cst_148 = arith.constant 0.000000e+00 : f32
      %428 = vector.broadcast %cst_148 : f32 to vector<1x1xf32>
      %c0_149 = arith.constant 0 : index
      %c0_150 = arith.constant 0 : index
      %429 = memref.load %arg2[%c0_149, %c0_150] : memref<1x1xf32, #tpu.memory_space<smem>>
      %430 = vector.broadcast %429 : f32 to vector<1x1xf32>
      %431 = arith.addf %428, %430 : vector<1x1xf32>
      %432 = math.exp %431 : vector<1x1xf32>
      %cst_151 = arith.constant dense<0.000000e+00> : vector<32x32xf32>
      %433 = tpu.matmul %418, %427, %cst_151 {dimension_numbers = #tpu.dot_dimension_numbers<[1], [1], [0], [0], [0, 0, 1, 0], [], []>} : vector<32x32xf32>, vector<32x32xf32>, vector<32x32xf32> -> vector<32x32xf32>
      %434 = vector.broadcast %432 : vector<1x1xf32> to vector<32x32xf32>
      %435 = arith.mulf %433, %434 : vector<32x32xf32>
      %436 = arith.mulf %418, %427 : vector<32x32xf32>
      %cst_152 = arith.constant dense<0.000000e+00> : vector<32xf32>
      %437 = vector.multi_reduction <add>, %436, %cst_152 [1] : vector<32x32xf32> to vector<32xf32>
      %438 = vector.shape_cast %437 : vector<32xf32> to vector<32x1xf32>
      %439 = vector.broadcast %432 : vector<1x1xf32> to vector<32x1xf32>
      %440 = arith.mulf %438, %439 : vector<32x1xf32>
      %cst_153 = arith.constant dense<0xFF800000> : vector<32xf32>
      %441 = vector.multi_reduction <maximumf>, %435, %cst_153 [1] : vector<32x32xf32> to vector<32xf32>
      %442 = vector.shape_cast %441 : vector<32xf32> to vector<32x1xf32>
      %443 = vector.broadcast %442 : vector<32x1xf32> to vector<32x32xf32>
      %444 = arith.subf %435, %443 : vector<32x32xf32>
      %445 = math.exp %444 : vector<32x32xf32>
      %cst_154 = arith.constant dense<0.000000e+00> : vector<32xf32>
      %446 = vector.multi_reduction <add>, %445, %cst_154 [1] : vector<32x32xf32> to vector<32xf32>
      %447 = vector.shape_cast %446 : vector<32xf32> to vector<32x1xf32>
      %448 = math.log %447 : vector<32x1xf32>
      %449 = arith.addf %442, %448 : vector<32x1xf32>
      %cst_155 = arith.constant dense<0xFF800000> : vector<32xf32>
      %450 = vector.multi_reduction <maximumf>, %435, %cst_155 [0] : vector<32x32xf32> to vector<32xf32>
      %451 = vector.shape_cast %450 : vector<32xf32> to vector<1x32xf32>
      %452 = vector.broadcast %451 : vector<1x32xf32> to vector<32x32xf32>
      %453 = arith.subf %435, %452 : vector<32x32xf32>
      %454 = math.exp %453 : vector<32x32xf32>
      %cst_156 = arith.constant dense<0.000000e+00> : vector<32xf32>
      %455 = vector.multi_reduction <add>, %454, %cst_156 [0] : vector<32x32xf32> to vector<32xf32>
      %456 = vector.shape_cast %455 : vector<32xf32> to vector<1x32xf32>
      %457 = math.log %456 : vector<1x32xf32>
      %458 = arith.addf %451, %457 : vector<1x32xf32>
      %cst_157 = arith.constant dense<0.000000e+00> : vector<1xf32>
      %459 = vector.multi_reduction <add>, %449, %cst_157 [0] : vector<32x1xf32> to vector<1xf32>
      %460 = vector.shape_cast %459 : vector<1xf32> to vector<1x1xf32>
      %cst_158 = arith.constant 3.200000e+01 : f32
      %461 = vector.broadcast %cst_158 : f32 to vector<1x1xf32>
      %462 = arith.divf %460, %461 : vector<1x1xf32>
      %cst_159 = arith.constant dense<0.000000e+00> : vector<1xf32>
      %463 = vector.multi_reduction <add>, %458, %cst_159 [1] : vector<1x32xf32> to vector<1xf32>
      %464 = vector.shape_cast %463 : vector<1xf32> to vector<1x1xf32>
      %cst_160 = arith.constant 3.200000e+01 : f32
      %465 = vector.broadcast %cst_160 : f32 to vector<1x1xf32>
      %466 = arith.divf %464, %465 : vector<1x1xf32>
      %467 = arith.addf %462, %466 : vector<1x1xf32>
      %cst_161 = arith.constant 5.000000e-01 : f32
      %468 = vector.broadcast %cst_161 : f32 to vector<1x1xf32>
      %469 = arith.mulf %468, %467 : vector<1x1xf32>
      %cst_162 = arith.constant dense<0.000000e+00> : vector<1xf32>
      %470 = vector.multi_reduction <add>, %440, %cst_162 [0] : vector<32x1xf32> to vector<1xf32>
      %471 = vector.shape_cast %470 : vector<1xf32> to vector<1x1xf32>
      %cst_163 = arith.constant 3.200000e+01 : f32
      %472 = vector.broadcast %cst_163 : f32 to vector<1x1xf32>
      %473 = arith.divf %471, %472 : vector<1x1xf32>
      %474 = arith.subf %469, %473 : vector<1x1xf32>
      %475 = vector.shape_cast %474 : vector<1x1xf32> to vector<1x1x1xf32>
      %c0_164 = arith.constant 0 : index
      %c0_165 = arith.constant 0 : index
      %c0_166 = arith.constant 0 : index
      %476 = vector.load %arg9[%c0_164, %c0_165, %c0_166] : memref<1x1x1xf32, #tpu.memory_space<vmem>>, vector<1x1x1xf32>
      tpu.vector_store %arg9[%c0_164, %c0_165, %c0_166], %475 {strides = array<i32>} : memref<1x1x1xf32, #tpu.memory_space<vmem>>, vector<1x1x1xf32>,
    } else {
    }
    %c0_i32_135 = arith.constant 0 : i32
    %401 = arith.cmpi ne, %arg0, %c0_i32_135 : i32
    %c1_i32_136 = arith.constant 1 : i32
    %402 = arith.cmpi eq, %arg1, %c1_i32_136 : i32
    %403 = arith.andi %401, %402 : i1
    %404 = arith.extui %403 : i1 to i32
    %c0_i32_137 = arith.constant 0 : i32
    %405 = arith.cmpi ne, %404, %c0_i32_137 : i32
    scf.if %405 {
      %cst_138 = arith.constant 0.000000e+00 : f32
      %406 = vector.broadcast %cst_138 : f32 to vector<1x1x1xf32>
      %c0_139 = arith.constant 0 : index
      %c0_140 = arith.constant 0 : index
      %c0_141 = arith.constant 0 : index
      %407 = vector.load %arg9[%c0_139, %c0_140, %c0_141] : memref<1x1x1xf32, #tpu.memory_space<vmem>>, vector<1x1x1xf32>
      tpu.vector_store %arg9[%c0_139, %c0_140, %c0_141], %406 {strides = array<i32>} : memref<1x1x1xf32, #tpu.memory_space<vmem>>, vector<1x1x1xf32>,
    } else {
    }
    return
  }
  func.func @transform_0(%arg0: i32, %arg1: i32) -> (i32, i32) {
    %c0_i32 = arith.constant 0 : i32
    %c0_i32_0 = arith.constant 0 : i32
    %c0_i32_1 = arith.constant 0 : i32
    return %c0_i32, %c0_i32_0 : i32, i32
  }
  func.func @transform_3(%arg0: i32, %arg1: i32) -> (i32, i32) {
    %c2_i32 = arith.constant 2 : i32
    %0 = arith.muli %arg0, %c2_i32 : i32
    %1 = arith.addi %0, %arg1 : i32
    %c0_i32 = arith.constant 0 : i32
    %c0_i32_0 = arith.constant 0 : i32
    return %1, %c0_i32 : i32, i32
  }
  func.func @transform_4(%arg0: i32, %arg1: i32) -> (i32, i32) {
    %c2_i32 = arith.constant 2 : i32
    %0 = arith.muli %arg0, %c2_i32 : i32
    %1 = arith.addi %0, %arg1 : i32
    %c0_i32 = arith.constant 0 : i32
    %c0_i32_0 = arith.constant 0 : i32
    return %1, %c0_i32 : i32, i32
  }
  func.func @transform_5(%arg0: i32, %arg1: i32) -> (i32, i32) {
    %c2_i32 = arith.constant 2 : i32
    %0 = arith.muli %arg0, %c2_i32 : i32
    %1 = arith.addi %0, %arg1 : i32
    %c0_i32 = arith.constant 0 : i32
    %c0_i32_0 = arith.constant 0 : i32
    return %1, %c0_i32 : i32, i32
  }
  func.func @transform_6(%arg0: i32, %arg1: i32) -> (i32, i32) {
    %c2_i32 = arith.constant 2 : i32
    %0 = arith.muli %arg0, %c2_i32 : i32
    %1 = arith.addi %0, %arg1 : i32
    %c0_i32 = arith.constant 0 : i32
    %c0_i32_0 = arith.constant 0 : i32
    return %1, %c0_i32 : i32, i32
  }
  func.func @transform_7(%arg0: i32, %arg1: i32) -> (i32, i32, i32) {
    %c0_i32 = arith.constant 0 : i32
    %c0_i32_0 = arith.constant 0 : i32
    %c0_i32_1 = arith.constant 0 : i32
    return %arg0, %c0_i32, %c0_i32_0 : i32, i32, i32
  }
  func.func @transform_8(%arg0: i32, %arg1: i32) -> (i32, i32, i32) {
    %c0_i32 = arith.constant 0 : i32
    %c0_i32_0 = arith.constant 0 : i32
    %c0_i32_1 = arith.constant 0 : i32
    return %arg0, %c0_i32, %c0_i32_0 : i32, i32, i32
  }
}

</mosaic_0001>

<llo_original>
// kernel: tpu_custom_call.1
$region0: #{tpu_custom_call.1}
  #allocation0 [shape = 'u32[]', space=smem, size = 0x4, offset = 0x4, fixed_abs, tag = 'smem constant byte address 0x4 - core index']
  #allocation1 [shape = 'u32[144,128]{1,0:T(1,128)}', space=vmem, size = 0x12000, scoped, tag = 'internal scratch']
  #allocation2 [shape = 'f32[1,1]{1,0:T(1,128)}', space=vmem, size = 0x200, scoped, tag = 'scratch operand']
  #allocation3 [shape = 'f32[32,32]{1,0:T(8,128)}', space=vmem, size = 0x4000, scoped, tag = 'scratch operand']
  #allocation4 [shape = 'f32[32,32]{1,0:T(8,128)}', space=vmem, size = 0x4000, scoped, tag = 'scratch operand']
  #allocation5 [shape = 's32[2]{0}', space=sflag, size = 0x8, scoped, tag = 'scratch operand']
  #allocation6 [shape = 'f32[1,1]{1,0:T(1,128)S(6)}', space=smem, size = 0x200, scoped, tag = 'scoped memory for tpu_custom_call.1']
  #allocation14 [shape = 's32[]', space=sflag, size = 0x4, offset = 0, fixed_abs, tag = 'sflag constant byte address 0x0 - dummy sync flag']
  #allocation15 [shape = 's32[]', space=sflag, size = 0x4, offset = 0, fixed_abs, tag = 'sflag constant byte address 0x0 - dummy sync flag']
  #allocation16 [shape = 'u32[]', space=smem, size = 0x4, offset = 0x44, fixed_abs, tag = 'smem constant byte address 0x44 - assertion arg 0']
  #allocation17 [shape = 'u32[]', space=smem, size = 0x4, offset = 0x48, fixed_abs, tag = 'smem constant byte address 0x48 - assertion arg 1']
  #allocation18 [shape = 's32[]', space=sflag, size = 0x4, offset = 0, fixed_abs, tag = 'sflag constant byte address 0x0 - dummy sync flag']
  #allocation19 [shape = 's32[]', space=sflag, size = 0x4, offset = 0, fixed_abs, tag = 'sflag constant byte address 0x0 - dummy sync flag']
  %s0 = inlined_call_operand.<no memory space> [shape: f32[1,1], index: 0, kind: input, shape index: {}]
  %s1 = inlined_call_operand.hbm [shape: f32[32,32], index: 1, kind: input, shape index: {}]
  %s2 = inlined_call_operand.hbm [shape: f32[32,32], index: 2, kind: input, shape index: {}]
  %s3 = inlined_call_operand.hbm [shape: f32[32,192], index: 3, kind: input, shape index: {}]
  %s4 = inlined_call_operand.hbm [shape: f32[32,192], index: 4, kind: input, shape index: {}]
  %s5 = inlined_call_operand.hbm [shape: f32[32,256], index: 5, kind: input, shape index: {}]
  %s6 = inlined_call_operand.hbm [shape: f32[32,256], index: 6, kind: input, shape index: {}]
  %s7 = inlined_call_operand.vmem [shape: f32[2,1,1], index: 7, kind: output, shape index: {0}]
  %s8 = inlined_call_operand.vmem [shape: f32[2,1,1], index: 8, kind: output, shape index: {1}]
  %9 = xla_tuple %s7, %s8
  %s10 = sld [smem:[#allocation0]]
  $region105: #{tpu_custom_call.1} parent=0
    _
  %s12 = ssub.s32 1, %s10
  %s13 = scalar_select 0, %s12, %s10
  %14 = sst [smem:[#allocation6]] %s0
  $region1: #{tpu_custom_call.1} parent=0
    #allocation7 [shape = 'u8[16384]{0}', space=vmem, size = 0x4000, scoped, tag = 'input window, operand 3']
    #allocation8 [shape = 's32[2]{0}', space=sflag, size = 0x8, scoped, tag = 'scoped memory for tpu_custom_call.1']
    #allocation9 [shape = 'u8[16384]{0}', space=vmem, size = 0x4000, scoped, tag = 'input window, operand 4']
    #allocation10 [shape = 's32[2]{0}', space=sflag, size = 0x8, scoped, tag = 'scoped memory for tpu_custom_call.1']
    #allocation11 [shape = 'u8[16384]{0}', space=vmem, size = 0x4000, scoped, tag = 'input window, operand 5']
    #allocation12 [shape = 'u8[16384]{0}', space=vmem, size = 0x4000, scoped, tag = 'input window, operand 6']
    #allocation13 [shape = 's32[2]{0}', space=sflag, size = 0x8, scoped, tag = 'scoped memory for tpu_custom_call.1']
    %15 = vsyncpa [#allocation8], 0
    %s16 = scalar_lea.sflag [#allocation8], 1
    %17 = vsyncpa %s16, 0
    %18 = vsyncpa [#allocation10], 0
    %s19 = scalar_lea.sflag [#allocation10], 1
    %20 = vsyncpa %s19, 0
    %21 = vsyncpa [#allocation13], 0
    %s22 = scalar_lea.sflag [#allocation13], 1
    %23 = vsyncpa %s22, 0
    loop: start=0, step=1, limit=6
    $region2: #{tpu_custom_call.1} parent=1 // loop_pre_header
      _
    $region3: #{tpu_custom_call.1} parent=1 // loop_header
      %s25 = sphi 0, %s29
      %p26 = scmp.ge.s32.totalorder %s25, 6
      %s32 = sphi 0, %s44
      %s33 = sphi 0, %s40
      %s34 = sphi 0, %s32
      %s35 = sphi 0, %s33
      %s36 = sphi 0, %s34
      %s37 = sphi 0, %s35
      %s45 = sphi 0, %s45
      %s47 = sphi 0, %s45
      %s48 = sphi 0, %s47
      %s62 = sphi 0, %s48
      %s72 = sphi 0, %s74
      %s75 = sphi 0, %s72
      %s76 = sphi 0, %s75
      %s92 = sphi 0, %s76
      %s102 = sphi 0, %s104
      %s105 = sphi 0, %s102
      %s106 = sphi 0, %s105
      %s122 = sphi 0, %s106
      %s132 = sphi 0, %s134
      %s135 = sphi 0, %s132
      %s136 = sphi 0, %s135
      %s152 = sphi 0, %s136
      %s162 = sphi 0, %s164
      %s165 = sphi 0, %s162
      %s166 = sphi 0, %s165
      %s182 = sphi 0, %s166
      %s188 = sphi 0, %s190
      %s191 = sphi 0, %s188
      %s192 = sphi 0, %s191
      %s208 = sphi 0, %s192
      %s214 = sphi 0, %s216
      %s217 = sphi 0, %s214
      %s218 = sphi 0, %s217
      %s234 = sphi 0, %s218
    $region4: #{tpu_custom_call.1} parent=1 // loop_header_branch
      %28 = sbr.rel (%p26) target = $region8
    $region5: #{tpu_custom_call.1} parent=1 // loop_body
      %s30 = ssub.s32 %s25, 1
      %s31 = ssub.s32 %s25, 2
      %s38 = sadd.s32 1, %s33
      %p39 = scmp.ge.s32.totalorder %s38, 2
      %s40 = scalar_select %p39, 0, %s38
      %s41 = sadd.s32 1, %s32
      %s42 = scalar_select %p39, %s41, %s32
      %p43 = scmp.ge.s32.totalorder %s42, 2
      %s44 = scalar_select %p43, 0, %s42
      %s46 = sadd.s32 %s45, 1
      %p49 = scmp.eq.s32.totalorder %s25, 3
      %p50 = scmp.ne.s32.totalorder %s45, %s47
      %p51 = scmp.eq.s32.totalorder %s25, 0
      %p52 = por %p50, %p51
      %p53 = scmp.ne.s32.totalorder %s45, %s47
      %p54 = scmp.eq.s32.totalorder %s30, 3
      %p55 = por %p53, %p54
      %p56 = scmp.ne.s32.totalorder %s47, %s48
      %p57 = scmp.eq.s32.totalorder %s30, 0
      %p58 = por %p56, %p57
      %p59 = scmp.ne.s32.totalorder %s47, %s48
      %p60 = scmp.eq.s32.totalorder %s31, 3
      %p61 = por %p59, %p60
      %p63 = scmp.ne.s32.totalorder %s48, %s62
      %p64 = scmp.eq.s32.totalorder %s31, 0
      %p65 = por %p63, %p64
      %s66 = smul.u32 %s32, 2
      %s67 = sadd.s32 %s66, %s33
      %s68 = smul.u32 %s44, 2
      %s69 = sadd.s32 %s68, %s40
      %s70 = ssub.s32 %s67, %s69
      %p71 = scmp.eq.s32.totalorder %s70, 0
      %s73 = sadd.s32 %s72, 1
      %s74 = scalar_select %p71, %s72, %s73
      %p77 = pneg %p71
      %p78 = scmp.eq.s32.totalorder %s25, 3
      %p79 = por %p77, %p78
      %p80 = scmp.ne.s32.totalorder %s72, %s75
      %p81 = scmp.eq.s32.totalorder %s25, 0
      %p82 = por %p80, %p81
      %p83 = scmp.ne.s32.totalorder %s72, %s75
      %p84 = scmp.eq.s32.totalorder %s30, 3
      %p85 = por %p83, %p84
      %p86 = scmp.ne.s32.totalorder %s75, %s76
      %p87 = scmp.eq.s32.totalorder %s30, 0
      %p88 = por %p86, %p87
      %p89 = scmp.ne.s32.totalorder %s75, %s76
      %p90 = scmp.eq.s32.totalorder %s31, 3
      %p91 = por %p89, %p90
      %p93 = scmp.ne.s32.totalorder %s76, %s92
      %p94 = scmp.eq.s32.totalorder %s31, 0
      %p95 = por %p93, %p94
      %s96 = smul.u32 %s32, 2
      %s97 = sadd.s32 %s96, %s33
      %s98 = smul.u32 %s44, 2
      %s99 = sadd.s32 %s98, %s40
      %s100 = ssub.s32 %s97, %s99
      %p101 = scmp.eq.s32.totalorder %s100, 0
      %s103 = sadd.s32 %s102, 1
      %s104 = scalar_select %p101, %s102, %s103
      %p107 = pneg %p101
      %p108 = scmp.eq.s32.totalorder %s25, 3
      %p109 = por %p107, %p108
      %p110 = scmp.ne.s32.totalorder %s102, %s105
      %p111 = scmp.eq.s32.totalorder %s25, 0
      %p112 = por %p110, %p111
      %p113 = scmp.ne.s32.totalorder %s102, %s105
      %p114 = scmp.eq.s32.totalorder %s30, 3
      %p115 = por %p113, %p114
      %p116 = scmp.ne.s32.totalorder %s105, %s106
      %p117 = scmp.eq.s32.totalorder %s30, 0
      %p118 = por %p116, %p117
      %p119 = scmp.ne.s32.totalorder %s105, %s106
      %p120 = scmp.eq.s32.totalorder %s31, 3
      %p121 = por %p119, %p120
      %p123 = scmp.ne.s32.totalorder %s106, %s122
      %p124 = scmp.eq.s32.totalorder %s31, 0
      %p125 = por %p123, %p124
      %s126 = smul.u32 %s32, 2
      %s127 = sadd.s32 %s126, %s33
      %s128 = smul.u32 %s44, 2
      %s129 = sadd.s32 %s128, %s40
      %s130 = ssub.s32 %s127, %s129
      %p131 = scmp.eq.s32.totalorder %s130, 0
      %s133 = sadd.s32 %s132, 1
      %s134 = scalar_select %p131, %s132, %s133
      %p137 = pneg %p131
      %p138 = scmp.eq.s32.totalorder %s25, 3
      %p139 = por %p137, %p138
      %p140 = scmp.ne.s32.totalorder %s132, %s135
      %p141 = scmp.eq.s32.totalorder %s25, 0
      %p142 = por %p140, %p141
      %p143 = scmp.ne.s32.totalorder %s132, %s135
      %p144 = scmp.eq.s32.totalorder %s30, 3
      %p145 = por %p143, %p144
      %p146 = scmp.ne.s32.totalorder %s135, %s136
      %p147 = scmp.eq.s32.totalorder %s30, 0
      %p148 = por %p146, %p147
      %p149 = scmp.ne.s32.totalorder %s135, %s136
      %p150 = scmp.eq.s32.totalorder %s31, 3
      %p151 = por %p149, %p150
      %p153 = scmp.ne.s32.totalorder %s136, %s152
      %p154 = scmp.eq.s32.totalorder %s31, 0
      %p155 = por %p153, %p154
      %s156 = smul.u32 %s32, 2
      %s157 = sadd.s32 %s156, %s33
      %s158 = smul.u32 %s44, 2
      %s159 = sadd.s32 %s158, %s40
      %s160 = ssub.s32 %s157, %s159
      %p161 = scmp.eq.s32.totalorder %s160, 0
      %s163 = sadd.s32 %s162, 1
      %s164 = scalar_select %p161, %s162, %s163
      %p167 = pneg %p161
      %p168 = scmp.eq.s32.totalorder %s25, 3
      %p169 = por %p167, %p168
      %p170 = scmp.ne.s32.totalorder %s162, %s165
      %p171 = scmp.eq.s32.totalorder %s25, 0
      %p172 = por %p170, %p171
      %p173 = scmp.ne.s32.totalorder %s162, %s165
      %p174 = scmp.eq.s32.totalorder %s30, 3
      %p175 = por %p173, %p174
      %p176 = scmp.ne.s32.totalorder %s165, %s166
      %p177 = scmp.eq.s32.totalorder %s30, 0
      %p178 = por %p176, %p177
      %p179 = scmp.ne.s32.totalorder %s165, %s166
      %p180 = scmp.eq.s32.totalorder %s31, 3
      %p181 = por %p179, %p180
      %p183 = scmp.ne.s32.totalorder %s166, %s182
      %p184 = scmp.eq.s32.totalorder %s31, 0
      %p185 = por %p183, %p184
      %s186 = ssub.s32 %s32, %s44
      %p187 = scmp.eq.s32.totalorder %s186, 0
      %s189 = sadd.s32 %s188, 1
      %s190 = scalar_select %p187, %s188, %s189
      %p193 = pneg %p187
      %p194 = scmp.eq.s32.totalorder %s25, 3
      %p195 = por %p193, %p194
      %p196 = scmp.ne.s32.totalorder %s188, %s191
      %p197 = scmp.eq.s32.totalorder %s25, 0
      %p198 = por %p196, %p197
      %p199 = scmp.ne.s32.totalorder %s188, %s191
      %p200 = scmp.eq.s32.totalorder %s30, 3
      %p201 = por %p199, %p200
      %p202 = scmp.ne.s32.totalorder %s191, %s192
      %p203 = scmp.eq.s32.totalorder %s30, 0
      %p204 = por %p202, %p203
      %p205 = scmp.ne.s32.totalorder %s191, %s192
      %p206 = scmp.eq.s32.totalorder %s31, 3
      %p207 = por %p205, %p206
      %p209 = scmp.ne.s32.totalorder %s192, %s208
      %p210 = scmp.eq.s32.totalorder %s31, 0
      %p211 = por %p209, %p210
      %s212 = ssub.s32 %s32, %s44
      %p213 = scmp.eq.s32.totalorder %s212, 0
      %s215 = sadd.s32 %s214, 1
      %s216 = scalar_select %p213, %s214, %s215
      %p219 = pneg %p213
      %p220 = scmp.eq.s32.totalorder %s25, 3
      %p221 = por %p219, %p220
      %p222 = scmp.ne.s32.totalorder %s214, %s217
      %p223 = scmp.eq.s32.totalorder %s25, 0
      %p224 = por %p222, %p223
      %p225 = scmp.ne.s32.totalorder %s214, %s217
      %p226 = scmp.eq.s32.totalorder %s30, 3
      %p227 = por %p225, %p226
      %p228 = scmp.ne.s32.totalorder %s217, %s218
      %p229 = scmp.eq.s32.totalorder %s30, 0
      %p230 = por %p228, %p229
      %p231 = scmp.ne.s32.totalorder %s217, %s218
      %p232 = scmp.eq.s32.totalorder %s31, 3
      %p233 = por %p231, %p232
      %p235 = scmp.ne.s32.totalorder %s218, %s234
      %p236 = scmp.eq.s32.totalorder %s31, 0
      %p237 = por %p235, %p236
      %p238 = scmp.le.s32.totalorder 1, %s25
      %p239 = scmp.lt.s32.totalorder %s25, 5
      %p240 = pnand %p238, %p239
      %p241 = pneg %p240
      // Predicated region
      $region9: #{tpu_custom_call.1} parent=5 // pred_check
        _
      $region10: #{tpu_custom_call.1} parent=5 // pred_check_branch
        %243 = sbr.rel (%p240) target = $region12
      $region11: #{tpu_custom_call.1} parent=5 // pred_region
        %s244 = ssub.s32 %s25, 1
        // Predicated region
        $region13: #{tpu_custom_call.1} parent=11 // pred_check
          %p245 = pneg %p58
        $region14: #{tpu_custom_call.1} parent=11 // pred_check_branch
          %247 = sbr.rel (%p245) target = $region16
        $region15: #{tpu_custom_call.1} parent=11 // pred_region
          _
        $region16: #{tpu_custom_call.1} parent=11 // pred_fallthru
          _
      $region12: #{tpu_custom_call.1} parent=5 // pred_fallthru
        _
      %p248 = scmp.lt.s32.totalorder %s25, 4
      // Predicated region
      $region17: #{tpu_custom_call.1} parent=5 // pred_check
        %p249 = pneg %p248
      $region18: #{tpu_custom_call.1} parent=5 // pred_check_branch
        %251 = sbr.rel (%p249) target = $region20
      $region19: #{tpu_custom_call.1} parent=5 // pred_region
        // Predicated region
        $region21: #{tpu_custom_call.1} parent=19 // pred_check
          %p252 = pneg %p82
        $region22: #{tpu_custom_call.1} parent=19 // pred_check_branch
          %254 = sbr.rel (%p252) target = $region24
        $region23: #{tpu_custom_call.1} parent=19 // pred_region
          %s255 = sand.u32 %s72, 1
          %s256 = scalar_lea.sflag [#allocation8], %s255
          %s257 = sand.u32 %s72, 1
          %s258 = smul.addr %s257, 16
          %s259 = scalar_lea.vmem [#allocation7], %s258
          %s260 = smul.u32 %s32, 2
          %s261 = sadd.s32 %s260, %s33
          %s263 = ssub.s32 256, 256
          %264 = vsyncadd %s256, %s263
          %s265 = smul.addr %s261, 2
          %s266 = smul.addr %s265, 128
          %s267 = scalar_lea.hbm %s3, %s266
          %s269 = sshll.u32 %s259, 4
          %s270 = int_to_ptr.vmem [resolvable:$true] %s269
          %272 = dma.hbm_to_vmem [thread:$0]  %s267, 256, %s270, %s256
        $region24: #{tpu_custom_call.1} parent=19 // pred_fallthru
          _
        // Predicated region
        $region25: #{tpu_custom_call.1} parent=19 // pred_check
          %p273 = pneg %p112
        $region26: #{tpu_custom_call.1} parent=19 // pred_check_branch
          %275 = sbr.rel (%p273) target = $region28
        $region27: #{tpu_custom_call.1} parent=19 // pred_region
          %s276 = sand.u32 %s25, 1
          %s277 = scalar_lea.sflag [#allocation10], %s276
          %s278 = sand.u32 %s102, 1
          %s279 = smul.addr %s278, 16
          %s280 = scalar_lea.vmem [#allocation9], %s279
          %s281 = smul.u32 %s32, 2
          %s282 = sadd.s32 %s281, %s33
          %s284 = ssub.s32 256, 256
          %285 = vsyncadd %s277, %s284
          %s286 = smul.addr %s282, 2
          %s287 = smul.addr %s286, 128
          %s288 = scalar_lea.hbm %s4, %s287
          %s290 = sshll.u32 %s280, 4
          %s291 = int_to_ptr.vmem [resolvable:$true] %s290
          %293 = dma.hbm_to_vmem [thread:$0]  %s288, 256, %s291, %s277
        $region28: #{tpu_custom_call.1} parent=19 // pred_fallthru
          _
        // Predicated region
        $region29: #{tpu_custom_call.1} parent=19 // pred_check
          %p294 = pneg %p142
        $region30: #{tpu_custom_call.1} parent=19 // pred_check_branch
          %296 = sbr.rel (%p294) target = $region32
        $region31: #{tpu_custom_call.1} parent=19 // pred_region
          %s297 = sand.u32 %s25, 1
          %s298 = scalar_lea.sflag [#allocation10], %s297
          %s299 = sand.u32 %s132, 1
          %s300 = smul.addr %s299, 16
          %s301 = scalar_lea.vmem [#allocation11], %s300
          %s302 = smul.u32 %s32, 2
          %s303 = sadd.s32 %s302, %s33
          %s305 = ssub.s32 256, 256
          %306 = vsyncadd %s298, %s305
          %s307 = smul.addr %s303, 2
          %s308 = smul.addr %s307, 128
          %s309 = scalar_lea.hbm %s5, %s308
          %s311 = sshll.u32 %s301, 4
          %s312 = int_to_ptr.vmem [resolvable:$true] %s311
          %314 = dma.hbm_to_vmem [thread:$0]  %s309, 256, %s312, %s298
        $region32: #{tpu_custom_call.1} parent=19 // pred_fallthru
          _
        // Predicated region
        $region33: #{tpu_custom_call.1} parent=19 // pred_check
          %p315 = pneg %p172
        $region34: #{tpu_custom_call.1} parent=19 // pred_check_branch
          %317 = sbr.rel (%p315) target = $region36
        $region35: #{tpu_custom_call.1} parent=19 // pred_region
          %s318 = sand.u32 %s162, 1
          %s319 = scalar_lea.sflag [#allocation13], %s318
          %s320 = sand.u32 %s162, 1
          %s321 = smul.addr %s320, 16
          %s322 = scalar_lea.vmem [#allocation12], %s321
          %s323 = smul.u32 %s32, 2
          %s324 = sadd.s32 %s323, %s33
          %s326 = ssub.s32 256, 256
          %327 = vsyncadd %s319, %s326
          %s328 = smul.addr %s324, 2
          %s329 = smul.addr %s328, 128
          %s330 = scalar_lea.hbm %s6, %s329
          %s332 = sshll.u32 %s322, 4
          %s333 = int_to_ptr.vmem [resolvable:$true] %s332
          %335 = dma.hbm_to_vmem [thread:$0]  %s330, 256, %s333, %s319
        $region36: #{tpu_custom_call.1} parent=19 // pred_fallthru
          _
      $region20: #{tpu_custom_call.1} parent=5 // pred_fallthru
        _
      %p336 = scmp.le.s32.totalorder 1, %s25
      %p337 = scmp.lt.s32.totalorder %s25, 5
      %p338 = pnand %p336, %p337
      %p339 = pneg %p338
      // Predicated region
      $region37: #{tpu_custom_call.1} parent=5 // pred_check
        _
      $region38: #{tpu_custom_call.1} parent=5 // pred_check_branch
        %341 = sbr.rel (%p338) target = $region40
      $region39: #{tpu_custom_call.1} parent=5 // pred_region
        %s342 = ssub.s32 %s25, 1
        %s343 = sand.u32 %s75, 1
        %s344 = scalar_lea.sflag [#allocation8], %s343
        %s345 = sand.u32 %s75, 1
        %s346 = smul.addr %s345, 16
        %s347 = scalar_lea.vmem [#allocation7], %s346
        // Predicated region
        $region41: #{tpu_custom_call.1} parent=39 // pred_check
          %p348 = pneg %p88
        $region42: #{tpu_custom_call.1} parent=39 // pred_check_branch
          %350 = sbr.rel (%p348) target = $region44
        $region43: #{tpu_custom_call.1} parent=39 // pred_region
          %351 = dma.done %s344, 256
        $region44: #{tpu_custom_call.1} parent=39 // pred_fallthru
          _
        %s352 = sand.u32 %s30, 1
        %s353 = scalar_lea.sflag [#allocation10], %s352
        %s354 = sand.u32 %s105, 1
        %s355 = smul.addr %s354, 16
        %s356 = scalar_lea.vmem [#allocation9], %s355
        // Predicated region
        $region45: #{tpu_custom_call.1} parent=39 // pred_check
          %p357 = pneg %p118
        $region46: #{tpu_custom_call.1} parent=39 // pred_check_branch
          %359 = sbr.rel (%p357) target = $region48
        $region47: #{tpu_custom_call.1} parent=39 // pred_region
          %360 = dma.done %s353, 256
        $region48: #{tpu_custom_call.1} parent=39 // pred_fallthru
          _
        %s361 = sand.u32 %s30, 1
        %s362 = scalar_lea.sflag [#allocation10], %s361
        %s363 = sand.u32 %s135, 1
        %s364 = smul.addr %s363, 16
        %s365 = scalar_lea.vmem [#allocation11], %s364
        // Predicated region
        $region49: #{tpu_custom_call.1} parent=39 // pred_check
          %p366 = pneg %p148
        $region50: #{tpu_custom_call.1} parent=39 // pred_check_branch
          %368 = sbr.rel (%p366) target = $region52
        $region51: #{tpu_custom_call.1} parent=39 // pred_region
          %369 = dma.done %s362, 256
        $region52: #{tpu_custom_call.1} parent=39 // pred_fallthru
          _
        %s370 = sand.u32 %s165, 1
        %s371 = scalar_lea.sflag [#allocation13], %s370
        %s372 = sand.u32 %s165, 1
        %s373 = smul.addr %s372, 16
        %s374 = scalar_lea.vmem [#allocation12], %s373
        // Predicated region
        $region53: #{tpu_custom_call.1} parent=39 // pred_check
          %p375 = pneg %p178
        $region54: #{tpu_custom_call.1} parent=39 // pred_check_branch
          %377 = sbr.rel (%p375) target = $region56
        $region55: #{tpu_custom_call.1} parent=39 // pred_region
          %378 = dma.done %s371, 256
        $region56: #{tpu_custom_call.1} parent=39 // pred_fallthru
          _
        %p379 = pneg %p58
        %p380 = pneg %p55
        %s381 = sand.u32 %s75, 1
        %s382 = scalar_lea.sflag [#allocation8], %s381
        %s383 = sand.u32 %s75, 1
        %s384 = smul.addr %s383, 16
        %s385 = scalar_lea.vmem [#allocation7], %s384
        %p386 = pneg %p88
        %p387 = pneg %p85
        %s388 = sand.u32 %s30, 1
        %s389 = scalar_lea.sflag [#allocation10], %s388
        %s390 = sand.u32 %s105, 1
        %s391 = smul.addr %s390, 16
        %s392 = scalar_lea.vmem [#allocation9], %s391
        %p393 = pneg %p118
        %p394 = pneg %p115
        %s395 = sand.u32 %s30, 1
        %s396 = scalar_lea.sflag [#allocation10], %s395
        %s397 = sand.u32 %s135, 1
        %s398 = smul.addr %s397, 16
        %s399 = scalar_lea.vmem [#allocation11], %s398
        %p400 = pneg %p148
        %p401 = pneg %p145
        %s402 = sand.u32 %s165, 1
        %s403 = scalar_lea.sflag [#allocation13], %s402
        %s404 = sand.u32 %s165, 1
        %s405 = smul.addr %s404, 16
        %s406 = scalar_lea.vmem [#allocation12], %s405
        %p407 = pneg %p178
        %p408 = pneg %p175
        %p409 = pneg %p204
        %p410 = pneg %p201
        %p411 = scmp.lt.s32.totalorder %s34, 1
        %s412 = scalar_select %p411, %s34, 1
        %s413 = scalar_lea.vmem %s7, %s412
        %p414 = pneg %p230
        %p415 = pneg %p227
        %p416 = scmp.lt.s32.totalorder %s34, 1
        %s417 = scalar_select %p416, %s34, 1
        %s418 = scalar_lea.vmem %s8, %s417
        %s419 = smul.u32 %s34, 2
        %s420 = sadd.s32 %s419, %s35
        %s421 = smul.u32 %s34, 2
        %s422 = sadd.s32 %s421, %s35
        %s423 = smul.u32 %s34, 2
        %s424 = sadd.s32 %s423, %s35
        %s425 = smul.u32 %s34, 2
        %s426 = sadd.s32 %s425, %s35
        %p427 = scmp.lt.s32.totalorder %s34, 1
        %s428 = scalar_select %p427, %s34, 1
        %s429 = scalar_lea.vmem %s7, %s428
        %p430 = scmp.lt.s32.totalorder %s34, 1
        %s431 = scalar_select %p430, %s34, 1
        %s432 = scalar_lea.vmem %s8, %s431
        %p433 = scmp.eq.s32.totalorder %s34, 0
        %p434 = scmp.eq.s32.totalorder %s35, 1
        %p435 = pnand %p433, %p434
        %p436 = pneg %p435
        %p437 = scmp.eq.s32.totalorder %s35, 0
        // Predicated region
        $region57: #{tpu_custom_call.1} parent=39 // pred_check
          %p438 = pneg %p437
        $region58: #{tpu_custom_call.1} parent=39 // pred_check_branch
          %440 = sbr.rel (%p438) target = $region60
        $region59: #{tpu_custom_call.1} parent=39 // pred_region
          %vm441 = vcmask 0
          %442 = vst.msk [vmem:[#allocation2] sm:$0x1] %vm441, 0.0
        $region60: #{tpu_custom_call.1} parent=39 // pred_fallthru
          _
        // Predicated region
        $region61: #{tpu_custom_call.1} parent=39 // pred_check
          _
        $region62: #{tpu_custom_call.1} parent=39 // pred_check_branch
          %444 = sbr.rel (%p435) target = $region64
        $region63: #{tpu_custom_call.1} parent=39 // pred_region
          // Predicated region
          $region65: #{tpu_custom_call.1} parent=63 // pred_check
            _
          $region66: #{tpu_custom_call.1} parent=63 // pred_check_branch
            %446 = sbr.rel target = $region68
          $region67: #{tpu_custom_call.1} parent=63 // pred_region
            %447 = sst [smem:[#allocation16]] [#allocation15]
            %448 = sst [smem:[#allocation17]] [#allocation14]
          $region68: #{tpu_custom_call.1} parent=63 // pred_fallthru
            _
          %450 = shalt.err (0)
          %s452 = sshll.u32 [#allocation3], 4
          %s453 = int_to_ptr.vmem [resolvable:$true] %s452
          %455 = dma.hbm_to_vmem [thread:$0]  %s1, 512, %s453, [#allocation5]
          %s456 = scalar_lea.sflag [#allocation5], 1
          // Predicated region
          $region69: #{tpu_custom_call.1} parent=63 // pred_check
            _
          $region70: #{tpu_custom_call.1} parent=63 // pred_check_branch
            %458 = sbr.rel target = $region72
          $region71: #{tpu_custom_call.1} parent=63 // pred_region
            %459 = sst [smem:[#allocation16]] [#allocation19]
            %460 = sst [smem:[#allocation17]] [#allocation18]
          $region72: #{tpu_custom_call.1} parent=63 // pred_fallthru
            _
          %462 = shalt.err (0)
          %s464 = sshll.u32 [#allocation4], 4
          %s465 = int_to_ptr.vmem [resolvable:$true] %s464
          %467 = dma.hbm_to_vmem [thread:$0]  %s2, 512, %s465, %s456
        $region64: #{tpu_custom_call.1} parent=39 // pred_fallthru
          _
        %v468 = vld [vmem:[%s347] sm:$0xff]
        %470 = vrot.lane.b32.xlu0 %v468, 96
        %v471 = vpop.permute.xlu0 %470
        %v473 = vadd.f32 %v468, %v471
        %474 = vrot.lane.b32.xlu0 %v468, 64
        %v475 = vpop.permute.xlu0 %474
        %v477 = vadd.f32 %v473, %v475
        %478 = vrot.lane.b32.xlu0 %v468, 32
        %v479 = vpop.permute.xlu0 %478
        %v481 = vadd.f32 %v477, %v479
        %v482 = vld [vmem:[%s347 + $0x8] sm:$0xff]
        %v483 = vadd.f32 %v481, %v482
        %485 = vrot.lane.b32.xlu0 %v482, 96
        %v486 = vpop.permute.xlu0 %485
        %v488 = vadd.f32 %v483, %v486
        %v489 = vmul.f32 %v488, 0.16666667
        %v490 = vmul.f32 %v489, %v489
        %vm491 = vcmask 261120
        %v492 = vsel %vm491, %v490, 0.0
        %493 = vadd.xlane.f32.xlu0 %v492
        %v494 = vpop.xlane.xlu0 %493
        %v495 = vmax.f32 %v494, 1e-24
        %v496 = vrsqrt.pop %v495
        %v497 = vmul.f32 %v489, %v496
        %v498 = vld [vmem:[%s356] sm:$0xff]
        %500 = vrot.lane.b32.xlu0 %v498, 96
        %v501 = vpop.permute.xlu0 %500
        %v503 = vadd.f32 %v498, %v501
        %504 = vrot.lane.b32.xlu0 %v498, 64
        %v505 = vpop.permute.xlu0 %504
        %v507 = vadd.f32 %v503, %v505
        %508 = vrot.lane.b32.xlu0 %v498, 32
        %v509 = vpop.permute.xlu0 %508
        %v511 = vadd.f32 %v507, %v509
        %v512 = vld [vmem:[%s356 + $0x8] sm:$0xff]
        %v513 = vadd.f32 %v511, %v512
        %515 = vrot.lane.b32.xlu0 %v512, 96
        %v516 = vpop.permute.xlu0 %515
        %v518 = vadd.f32 %v513, %v516
        %v519 = vmul.f32 %v518, 0.16666667
        %v520 = vmul.f32 %v519, %v519
        %v521 = vsel %vm491, %v520, 0.0
        %522 = vadd.xlane.f32.xlu0 %v521
        %v523 = vpop.xlane.xlu0 %522
        %v524 = vmax.f32 %v523, 1e-24
        %v525 = vrsqrt.pop %v524
        %v526 = vmul.f32 %v519, %v525
        %v527 = vmul.f32 %v497, %v526
        %v528 = vsel %vm491, %v527, 0.0
        %529 = vadd.xlane.f32.xlu0 %v528
        %v530 = vpop.xlane.xlu0 %529
        %v531 = vmul.f32 %v530, 14.285714
        %v532 = vld [vmem:[%s365] sm:$0xff]
        %v533 = vmul.f32 %v497, %v532
        %v534 = vsel %vm491, %v533, 0.0
        %535 = vadd.xlane.f32.xlu0 %v534
        %v536 = vpop.xlane.xlu0 %535
        %v537 = vmul.f32 %v532, %v532
        %v538 = vsel %vm491, %v537, 0.0
        %539 = vadd.xlane.f32.xlu0 %v538
        %v540 = vpop.xlane.xlu0 %539
        %v541 = vmax.f32 %v540, 1e-24
        %v542 = vrsqrt.pop %v541
        %v543 = vmul.f32 %v536, %v542
        %v544 = vmul.f32 %v543, 14.285714
        %v545 = vmax.f32 %v531, %v544
        %v546 = vsub.f32 %v531, %v545
        %v547 = vmul.f32 %v546, 1.442695
        %v548 = vpow.pop %v547
        %v549 = vsub.f32 %v544, %v545
        %v550 = vmul.f32 %v549, 1.442695
        %v551 = vpow.pop %v550
        %v552 = vadd.f32 %v548, %v551
        %554 = vrot.lane.b32.xlu0 %v532, 96
        %v555 = vpop.permute.xlu0 %554
        %v557 = vmul.f32 %v497, %v555
        %v558 = vsel %vm491, %v557, 0.0
        %559 = vadd.xlane.f32.xlu0 %v558
        %v560 = vpop.xlane.xlu0 %559
        %562 = vrot.lane.b32.xlu0 %v537, 96
        %v563 = vpop.permute.xlu0 %562
        %v565 = vsel %vm491, %v563, 0.0
        %566 = vadd.xlane.f32.xlu0 %v565
        %v567 = vpop.xlane.xlu0 %566
        %v568 = vmax.f32 %v567, 1e-24
        %v569 = vrsqrt.pop %v568
        %v570 = vmul.f32 %v560, %v569
        %v571 = vmul.f32 %v570, 14.285714
        %v572 = vmax.f32 %v545, %v571
        %v573 = vsub.f32 %v545, %v572
        %v574 = vmul.f32 %v573, 1.442695
        %v575 = vpow.pop %v574
        %v576 = vmul.f32 %v552, %v575
        %v577 = vsub.f32 %v571, %v572
        %v578 = vmul.f32 %v577, 1.442695
        %v579 = vpow.pop %v578
        %v580 = vadd.f32 %v576, %v579
        %581 = vrot.lane.b32.xlu0 %v532, 64
        %v582 = vpop.permute.xlu0 %581
        %v584 = vmul.f32 %v497, %v582
        %v585 = vsel %vm491, %v584, 0.0
        %586 = vadd.xlane.f32.xlu0 %v585
        %v587 = vpop.xlane.xlu0 %586
        %588 = vrot.lane.b32.xlu0 %v537, 64
        %v589 = vpop.permute.xlu0 %588
        %v591 = vsel %vm491, %v589, 0.0
        %592 = vadd.xlane.f32.xlu0 %v591
        %v593 = vpop.xlane.xlu0 %592
        %v594 = vmax.f32 %v593, 1e-24
        %v595 = vrsqrt.pop %v594
        %v596 = vmul.f32 %v587, %v595
        %v597 = vmul.f32 %v596, 14.285714
        %v598 = vmax.f32 %v572, %v597
        %v599 = vsub.f32 %v572, %v598
        %v600 = vmul.f32 %v599, 1.442695
        %v601 = vpow.pop %v600
        %v602 = vmul.f32 %v580, %v601
        %v603 = vsub.f32 %v597, %v598
        %v604 = vmul.f32 %v603, 1.442695
        %v605 = vpow.pop %v604
        %v606 = vadd.f32 %v602, %v605
        %607 = vrot.lane.b32.xlu0 %v532, 32
        %v608 = vpop.permute.xlu0 %607
        %v610 = vmul.f32 %v497, %v608
        %v611 = vsel %vm491, %v610, 0.0
        %612 = vadd.xlane.f32.xlu0 %v611
        %v613 = vpop.xlane.xlu0 %612
        %614 = vrot.lane.b32.xlu0 %v537, 32
        %v615 = vpop.permute.xlu0 %614
        %v617 = vsel %vm491, %v615, 0.0
        %618 = vadd.xlane.f32.xlu0 %v617
        %v619 = vpop.xlane.xlu0 %618
        %v620 = vmax.f32 %v619, 1e-24
        %v621 = vrsqrt.pop %v620
        %v622 = vmul.f32 %v613, %v621
        %v623 = vmul.f32 %v622, 14.285714
        %v624 = vmax.f32 %v598, %v623
        %v625 = vsub.f32 %v598, %v624
        %v626 = vmul.f32 %v625, 1.442695
        %v627 = vpow.pop %v626
        %v628 = vmul.f32 %v606, %v627
        %v629 = vsub.f32 %v623, %v624
        %v630 = vmul.f32 %v629, 1.442695
        %v631 = vpow.pop %v630
        %v632 = vadd.f32 %v628, %v631
        %v633 = vld [vmem:[%s365 + $0x8] sm:$0xff]
        %v634 = vmul.f32 %v497, %v633
        %v635 = vsel %vm491, %v634, 0.0
        %636 = vadd.xlane.f32.xlu0 %v635
        %v637 = vpop.xlane.xlu0 %636
        %v638 = vmul.f32 %v633, %v633
        %v639 = vsel %vm491, %v638, 0.0
        %640 = vadd.xlane.f32.xlu0 %v639
        %v641 = vpop.xlane.xlu0 %640
        %v642 = vmax.f32 %v641, 1e-24
        %v643 = vrsqrt.pop %v642
        %v644 = vmul.f32 %v637, %v643
        %v645 = vmul.f32 %v644, 14.285714
        %v646 = vmax.f32 %v624, %v645
        %v647 = vsub.f32 %v624, %v646
        %v648 = vmul.f32 %v647, 1.442695
        %v649 = vpow.pop %v648
        %v650 = vmul.f32 %v632, %v649
        %v651 = vsub.f32 %v645, %v646
        %v652 = vmul.f32 %v651, 1.442695
        %v653 = vpow.pop %v652
        %v654 = vadd.f32 %v650, %v653
        %656 = vrot.lane.b32.xlu0 %v633, 96
        %v657 = vpop.permute.xlu0 %656
        %v659 = vmul.f32 %v497, %v657
        %v660 = vsel %vm491, %v659, 0.0
        %661 = vadd.xlane.f32.xlu0 %v660
        %v662 = vpop.xlane.xlu0 %661
        %664 = vrot.lane.b32.xlu0 %v638, 96
        %v665 = vpop.permute.xlu0 %664
        %v667 = vsel %vm491, %v665, 0.0
        %668 = vadd.xlane.f32.xlu0 %v667
        %v669 = vpop.xlane.xlu0 %668
        %v670 = vmax.f32 %v669, 1e-24
        %v671 = vrsqrt.pop %v670
        %v672 = vmul.f32 %v662, %v671
        %v673 = vmul.f32 %v672, 14.285714
        %v674 = vmax.f32 %v646, %v673
        %v675 = vsub.f32 %v646, %v674
        %v676 = vmul.f32 %v675, 1.442695
        %v677 = vpow.pop %v676
        %v678 = vmul.f32 %v654, %v677
        %v679 = vsub.f32 %v673, %v674
        %v680 = vmul.f32 %v679, 1.442695
        %v681 = vpow.pop %v680
        %v682 = vadd.f32 %v678, %v681
        %683 = vrot.lane.b32.xlu0 %v633, 64
        %v684 = vpop.permute.xlu0 %683
        %v686 = vmul.f32 %v497, %v684
        %v687 = vsel %vm491, %v686, 0.0
        %688 = vadd.xlane.f32.xlu0 %v687
        %v689 = vpop.xlane.xlu0 %688
        %690 = vrot.lane.b32.xlu0 %v638, 64
        %v691 = vpop.permute.xlu0 %690
        %v693 = vsel %vm491, %v691, 0.0
        %694 = vadd.xlane.f32.xlu0 %v693
        %v695 = vpop.xlane.xlu0 %694
        %v696 = vmax.f32 %v695, 1e-24
        %v697 = vrsqrt.pop %v696
        %v698 = vmul.f32 %v689, %v697
        %v699 = vmul.f32 %v698, 14.285714
        %v700 = vmax.f32 %v674, %v699
        %v701 = vsub.f32 %v674, %v700
        %v702 = vmul.f32 %v701, 1.442695
        %v703 = vpow.pop %v702
        %v704 = vmul.f32 %v682, %v703
        %v705 = vsub.f32 %v699, %v700
        %v706 = vmul.f32 %v705, 1.442695
        %v707 = vpow.pop %v706
        %v708 = vadd.f32 %v704, %v707
        %709 = vrot.lane.b32.xlu0 %v633, 32
        %v710 = vpop.permute.xlu0 %709
        %v712 = vmul.f32 %v497, %v710
        %v713 = vsel %vm491, %v712, 0.0
        %714 = vadd.xlane.f32.xlu0 %v713
        %v715 = vpop.xlane.xlu0 %714
        %716 = vrot.lane.b32.xlu0 %v638, 32
        %v717 = vpop.permute.xlu0 %716
        %v719 = vsel %vm491, %v717, 0.0
        %720 = vadd.xlane.f32.xlu0 %v719
        %v721 = vpop.xlane.xlu0 %720
        %v722 = vmax.f32 %v721, 1e-24
        %v723 = vrsqrt.pop %v722
        %v724 = vmul.f32 %v715, %v723
        %v725 = vmul.f32 %v724, 14.285714
        %v726 = vmax.f32 %v700, %v725
        %v727 = vsub.f32 %v700, %v726
        %v728 = vmul.f32 %v727, 1.442695
        %v729 = vpow.pop %v728
        %v730 = vmul.f32 %v708, %v729
        %v731 = vsub.f32 %v725, %v726
        %v732 = vmul.f32 %v731, 1.442695
        %v733 = vpow.pop %v732
        %v734 = vadd.f32 %v730, %v733
        %v735 = vlog2.pop %v734
        %v736 = vmul.f32 %v735, 0.6931472
        %v737 = vadd.f32 %v726, %v736
        %v738 = vsub.f32 %v737, %v531
        %v739 = vld [vmem:[%s374] sm:$0xff]
        %v740 = vmul.f32 %v526, %v739
        %v741 = vsel %vm491, %v740, 0.0
        %742 = vadd.xlane.f32.xlu0 %v741
        %v743 = vpop.xlane.xlu0 %742
        %v744 = vmul.f32 %v739, %v739
        %v745 = vsel %vm491, %v744, 0.0
        %746 = vadd.xlane.f32.xlu0 %v745
        %v747 = vpop.xlane.xlu0 %746
        %v748 = vmax.f32 %v747, 1e-24
        %v749 = vrsqrt.pop %v748
        %v750 = vmul.f32 %v743, %v749
        %v751 = vmul.f32 %v750, 14.285714
        %v752 = vmax.f32 %v531, %v751
        %v753 = vsub.f32 %v531, %v752
        %v754 = vmul.f32 %v753, 1.442695
        %v755 = vpow.pop %v754
        %v756 = vsub.f32 %v751, %v752
        %v757 = vmul.f32 %v756, 1.442695
        %v758 = vpow.pop %v757
        %v759 = vadd.f32 %v755, %v758
        %761 = vrot.lane.b32.xlu0 %v739, 96
        %v762 = vpop.permute.xlu0 %761
        %v764 = vmul.f32 %v526, %v762
        %v765 = vsel %vm491, %v764, 0.0
        %766 = vadd.xlane.f32.xlu0 %v765
        %v767 = vpop.xlane.xlu0 %766
        %769 = vrot.lane.b32.xlu0 %v744, 96
        %v770 = vpop.permute.xlu0 %769
        %v772 = vsel %vm491, %v770, 0.0
        %773 = vadd.xlane.f32.xlu0 %v772
        %v774 = vpop.xlane.xlu0 %773
        %v775 = vmax.f32 %v774, 1e-24
        %v776 = vrsqrt.pop %v775
        %v777 = vmul.f32 %v767, %v776
        %v778 = vmul.f32 %v777, 14.285714
        %v779 = vmax.f32 %v752, %v778
        %v780 = vsub.f32 %v752, %v779
        %v781 = vmul.f32 %v780, 1.442695
        %v782 = vpow.pop %v781
        %v783 = vmul.f32 %v759, %v782
        %v784 = vsub.f32 %v778, %v779
        %v785 = vmul.f32 %v784, 1.442695
        %v786 = vpow.pop %v785
        %v787 = vadd.f32 %v783, %v786
        %788 = vrot.lane.b32.xlu0 %v739, 64
        %v789 = vpop.permute.xlu0 %788
        %v791 = vmul.f32 %v526, %v789
        %v792 = vsel %vm491, %v791, 0.0
        %793 = vadd.xlane.f32.xlu0 %v792
        %v794 = vpop.xlane.xlu0 %793
        %795 = vrot.lane.b32.xlu0 %v744, 64
        %v796 = vpop.permute.xlu0 %795
        %v798 = vsel %vm491, %v796, 0.0
        %799 = vadd.xlane.f32.xlu0 %v798
        %v800 = vpop.xlane.xlu0 %799
        %v801 = vmax.f32 %v800, 1e-24
        %v802 = vrsqrt.pop %v801
        %v803 = vmul.f32 %v794, %v802
        %v804 = vmul.f32 %v803, 14.285714
        %v805 = vmax.f32 %v779, %v804
        %v806 = vsub.f32 %v779, %v805
        %v807 = vmul.f32 %v806, 1.442695
        %v808 = vpow.pop %v807
        %v809 = vmul.f32 %v787, %v808
        %v810 = vsub.f32 %v804, %v805
        %v811 = vmul.f32 %v810, 1.442695
        %v812 = vpow.pop %v811
        %v813 = vadd.f32 %v809, %v812
        %814 = vrot.lane.b32.xlu0 %v739, 32
        %v815 = vpop.permute.xlu0 %814
        %v817 = vmul.f32 %v526, %v815
        %v818 = vsel %vm491, %v817, 0.0
        %819 = vadd.xlane.f32.xlu0 %v818
        %v820 = vpop.xlane.xlu0 %819
        %821 = vrot.lane.b32.xlu0 %v744, 32
        %v822 = vpop.permute.xlu0 %821
        %v824 = vsel %vm491, %v822, 0.0
        %825 = vadd.xlane.f32.xlu0 %v824
        %v826 = vpop.xlane.xlu0 %825
        %v827 = vmax.f32 %v826, 1e-24
        %v828 = vrsqrt.pop %v827
        %v829 = vmul.f32 %v820, %v828
        %v830 = vmul.f32 %v829, 14.285714
        %v831 = vmax.f32 %v805, %v830
        %v832 = vsub.f32 %v805, %v831
        %v833 = vmul.f32 %v832, 1.442695
        %v834 = vpow.pop %v833
        %v835 = vmul.f32 %v813, %v834
        %v836 = vsub.f32 %v830, %v831
        %v837 = vmul.f32 %v836, 1.442695
        %v838 = vpow.pop %v837
        %v839 = vadd.f32 %v835, %v838
        %v840 = vld [vmem:[%s374 + $0x8] sm:$0xff]
        %v841 = vmul.f32 %v526, %v840
        %v842 = vsel %vm491, %v841, 0.0
        %843 = vadd.xlane.f32.xlu0 %v842
        %v844 = vpop.xlane.xlu0 %843
        %v845 = vmul.f32 %v840, %v840
        %v846 = vsel %vm491, %v845, 0.0
        %847 = vadd.xlane.f32.xlu0 %v846
        %v848 = vpop.xlane.xlu0 %847
        %v849 = vmax.f32 %v848, 1e-24
        %v850 = vrsqrt.pop %v849
        %v851 = vmul.f32 %v844, %v850
        %v852 = vmul.f32 %v851, 14.285714
        %v853 = vmax.f32 %v831, %v852
        %v854 = vsub.f32 %v831, %v853
        %v855 = vmul.f32 %v854, 1.442695
        %v856 = vpow.pop %v855
        %v857 = vmul.f32 %v839, %v856
        %v858 = vsub.f32 %v852, %v853
        %v859 = vmul.f32 %v858, 1.442695
        %v860 = vpow.pop %v859
        %v861 = vadd.f32 %v857, %v860
        %863 = vrot.lane.b32.xlu0 %v840, 96
        %v864 = vpop.permute.xlu0 %863
        %v866 = vmul.f32 %v526, %v864
        %v867 = vsel %vm491, %v866, 0.0
        %868 = vadd.xlane.f32.xlu0 %v867
        %v869 = vpop.xlane.xlu0 %868
        %871 = vrot.lane.b32.xlu0 %v845, 96
        %v872 = vpop.permute.xlu0 %871
        %v874 = vsel %vm491, %v872, 0.0
        %875 = vadd.xlane.f32.xlu0 %v874
        %v876 = vpop.xlane.xlu0 %875
        %v877 = vmax.f32 %v876, 1e-24
        %v878 = vrsqrt.pop %v877
        %v879 = vmul.f32 %v869, %v878
        %v880 = vmul.f32 %v879, 14.285714
        %v881 = vmax.f32 %v853, %v880
        %v882 = vsub.f32 %v853, %v881
        %v883 = vmul.f32 %v882, 1.442695
        %v884 = vpow.pop %v883
        %v885 = vmul.f32 %v861, %v884
        %v886 = vsub.f32 %v880, %v881
        %v887 = vmul.f32 %v886, 1.442695
        %v888 = vpow.pop %v887
        %v889 = vadd.f32 %v885, %v888
        %890 = vrot.lane.b32.xlu0 %v840, 64
        %v891 = vpop.permute.xlu0 %890
        %v893 = vmul.f32 %v526, %v891
        %v894 = vsel %vm491, %v893, 0.0
        %895 = vadd.xlane.f32.xlu0 %v894
        %v896 = vpop.xlane.xlu0 %895
        %897 = vrot.lane.b32.xlu0 %v845, 64
        %v898 = vpop.permute.xlu0 %897
        %v900 = vsel %vm491, %v898, 0.0
        %901 = vadd.xlane.f32.xlu0 %v900
        %v902 = vpop.xlane.xlu0 %901
        %v903 = vmax.f32 %v902, 1e-24
        %v904 = vrsqrt.pop %v903
        %v905 = vmul.f32 %v896, %v904
        %v906 = vmul.f32 %v905, 14.285714
        %v907 = vmax.f32 %v881, %v906
        %v908 = vsub.f32 %v881, %v907
        %v909 = vmul.f32 %v908, 1.442695
        %v910 = vpow.pop %v909
        %v911 = vmul.f32 %v889, %v910
        %v912 = vsub.f32 %v906, %v907
        %v913 = vmul.f32 %v912, 1.442695
        %v914 = vpow.pop %v913
        %v915 = vadd.f32 %v911, %v914
        %916 = vrot.lane.b32.xlu0 %v840, 32
        %v917 = vpop.permute.xlu0 %916
        %v919 = vmul.f32 %v526, %v917
        %v920 = vsel %vm491, %v919, 0.0
        %921 = vadd.xlane.f32.xlu0 %v920
        %v922 = vpop.xlane.xlu0 %921
        %923 = vrot.lane.b32.xlu0 %v845, 32
        %v924 = vpop.permute.xlu0 %923
        %v926 = vsel %vm491, %v924, 0.0
        %927 = vadd.xlane.f32.xlu0 %v926
        %v928 = vpop.xlane.xlu0 %927
        %v929 = vmax.f32 %v928, 1e-24
        %v930 = vrsqrt.pop %v929
        %v931 = vmul.f32 %v922, %v930
        %v932 = vmul.f32 %v931, 14.285714
        %v933 = vmax.f32 %v907, %v932
        %v934 = vsub.f32 %v907, %v933
        %v935 = vmul.f32 %v934, 1.442695
        %v936 = vpow.pop %v935
        %v937 = vmul.f32 %v915, %v936
        %v938 = vsub.f32 %v932, %v933
        %v939 = vmul.f32 %v938, 1.442695
        %v940 = vpow.pop %v939
        %v941 = vadd.f32 %v937, %v940
        %v942 = vlog2.pop %v941
        %v943 = vmul.f32 %v942, 0.6931472
        %v944 = vadd.f32 %v933, %v943
        %v945 = vsub.f32 %v944, %v531
        %v946 = vadd.f32 %v738, %v945
        %v947 = vmul.f32 %v946, 0.5
        %v948 = vld [vmem:[#allocation2] sm:$0x1]
        %v949 = vrot.slane %v947, 4
        %v950 = vadd.f32 %v947, %v949
        %v951 = vrot.slane %v950, 2
        %v952 = vadd.f32 %v950, %v951
        %v953 = vrot.slane %v952, 1
        %v954 = vadd.f32 %v952, %v953
        %v955 = vadd.f32 %v948, %v954
        %vm956 = vcmask 0
        %957 = vst.msk [vmem:[#allocation2] sm:$0x1] %vm956, %v955
        // Predicated region
        $region73: #{tpu_custom_call.1} parent=39 // pred_check
          %p958 = pneg %p434
        $region74: #{tpu_custom_call.1} parent=39 // pred_check_branch
          %960 = sbr.rel (%p958) target = $region76
        $region75: #{tpu_custom_call.1} parent=39 // pred_region
          %v961 = vld [vmem:[#allocation2] sm:$0x1]
          %v962 = vmul.f32 %v961, 0.03125
          %963 = vst.msk [vmem:[%s432] sm:$0x1] %vm956, %v962
        $region76: #{tpu_custom_call.1} parent=39 // pred_fallthru
          _
        // Predicated region
        $region77: #{tpu_custom_call.1} parent=39 // pred_check
          _
        $region78: #{tpu_custom_call.1} parent=39 // pred_check_branch
          %965 = sbr.rel (%p435) target = $region80
        $region79: #{tpu_custom_call.1} parent=39 // pred_region
          %s966 = smul.u32 32, 1
          %s967 = sshll.u32 %s966, 4
          %968 = dma.done [#allocation5], %s967
          %s969 = scalar_lea.sflag [#allocation5], 1
          %s970 = sshll.u32 %s966, 4
          %971 = dma.done %s969, %s970
          %v972 = vld [vmem:[#allocation3] sm:$0xff]
          %v973 = vld [vmem:[#allocation3 + $0x8] sm:$0xff]
          %v974 = vld [vmem:[#allocation3 + $0x10] sm:$0xff]
          %v975 = vld [vmem:[#allocation3 + $0x18] sm:$0xff]
          %v976 = vmul.f32 %v972, %v972
          %v977 = vmul.f32 %v973, %v973
          %v978 = vmul.f32 %v974, %v974
          %v979 = vmul.f32 %v975, %v975
          %v980 = vsel %vm491, %v976, 0.0
          %981 = vadd.xlane.f32.xlu0 %v980
          %v982 = vpop.xlane.xlu0 %981
          %v983 = vsel %vm491, %v977, 0.0
          %984 = vadd.xlane.f32.xlu0 %v983
          %v985 = vpop.xlane.xlu0 %984
          %v986 = vsel %vm491, %v978, 0.0
          %987 = vadd.xlane.f32.xlu0 %v986
          %v988 = vpop.xlane.xlu0 %987
          %v989 = vsel %vm491, %v979, 0.0
          %990 = vadd.xlane.f32.xlu0 %v989
          %v991 = vpop.xlane.xlu0 %990
          %v992 = vmax.f32 %v982, 1e-24
          %v993 = vmax.f32 %v985, 1e-24
          %v994 = vmax.f32 %v988, 1e-24
          %v995 = vmax.f32 %v991, 1e-24
          %v996 = vrsqrt.pop %v992
          %v997 = vrsqrt.pop %v993
          %v998 = vrsqrt.pop %v994
          %v999 = vrsqrt.pop %v995
          %v1000 = vmul.f32 %v972, %v996
          %v1001 = vmul.f32 %v973, %v997
          %v1002 = vmul.f32 %v974, %v998
          %v1003 = vmul.f32 %v975, %v999
          %v1004 = vld [vmem:[#allocation4] sm:$0xff]
          %v1005 = vld [vmem:[#allocation4 + $0x8] sm:$0xff]
          %v1006 = vld [vmem:[#allocation4 + $0x10] sm:$0xff]
          %v1007 = vld [vmem:[#allocation4 + $0x18] sm:$0xff]
          %v1008 = vmul.f32 %v1004, %v1004
          %v1009 = vmul.f32 %v1005, %v1005
          %v1010 = vmul.f32 %v1006, %v1006
          %v1011 = vmul.f32 %v1007, %v1007
          %v1012 = vsel %vm491, %v1008, 0.0
          %1013 = vadd.xlane.f32.xlu0 %v1012
          %v1014 = vpop.xlane.xlu0 %1013
          %v1015 = vsel %vm491, %v1009, 0.0
          %1016 = vadd.xlane.f32.xlu0 %v1015
          %v1017 = vpop.xlane.xlu0 %1016
          %v1018 = vsel %vm491, %v1010, 0.0
          %1019 = vadd.xlane.f32.xlu0 %v1018
          %v1020 = vpop.xlane.xlu0 %1019
          %v1021 = vsel %vm491, %v1011, 0.0
          %1022 = vadd.xlane.f32.xlu0 %v1021
          %v1023 = vpop.xlane.xlu0 %1022
          %v1024 = vmax.f32 %v1014, 1e-24
          %v1025 = vmax.f32 %v1017, 1e-24
          %v1026 = vmax.f32 %v1020, 1e-24
          %v1027 = vmax.f32 %v1023, 1e-24
          %v1028 = vrsqrt.pop %v1024
          %v1029 = vrsqrt.pop %v1025
          %v1030 = vrsqrt.pop %v1026
          %v1031 = vrsqrt.pop %v1027
          %v1032 = vmul.f32 %v1004, %v1028
          %v1033 = vmul.f32 %v1005, %v1029
          %v1034 = vmul.f32 %v1006, %v1030
          %v1035 = vmul.f32 %v1007, %v1031
          %s1036 = sld [smem:[#allocation6]]
          %v1037 = vstv %s1036
          %v1038 = vadd.f32 %v1037, 0.0
          %v1039 = vmul.f32 %v1038, 1.442695
          %v1040 = vpow.pop %v1039
          %v1042 = vsel %vm491, %v1000, 0
          %v1045 = vsel %vm491, %v1001, 0
          %v1048 = vsel %vm491, %v1002, 0
          %v1051 = vsel %vm491, %v1003, 0
          %v1054 = vsel %vm491, %v1032, 0
          %v1057 = vsel %vm491, %v1033, 0
          %v1060 = vsel %vm491, %v1034, 0
          %v1063 = vsel %vm491, %v1035, 0
          %1065 = vmatprep.subr.mxu0 0.0
          %1066 = vmatpush1.xpose.msra.mxu0 0.0
          %1067 = vmatprep.subr.mxu0 0.0
          %1068 = vmatpush1.xpose.msra.mxu0 0.0
          %1069 = vmatprep.subr.mxu0 0.0
          %1070 = vmatpush1.xpose.msra.mxu0 0.0
          %1071 = vmatprep.subr.mxu0 0.0
          %1072 = vmatpush1.xpose.msra.mxu0 0.0
          %1073 = vmatprep.subr.mxu0 0.0
          %1074 = vmatpush1.xpose.msra.mxu0 0.0
          %1075 = vmatprep.subr.mxu0 0.0
          %1076 = vmatpush1.xpose.msra.mxu0 0.0
          %1077 = vmatprep.subr.mxu0 0.0
          %1078 = vmatpush1.xpose.msra.mxu0 0.0
          %1079 = vmatprep.subr.mxu0 0.0
          %1080 = vmatpush1.xpose.msra.mxu0 0.0
          %1081 = vmatprep.subr.mxu0 0.0
          %1082 = vmatpush1.xpose.msra.mxu0 0.0
          %1083 = vmatprep.subr.mxu0 0.0
          %1084 = vmatpush1.xpose.msra.mxu0 0.0
          %1085 = vmatprep.subr.mxu0 0.0
          %1086 = vmatpush1.xpose.msra.mxu0 0.0
          %1087 = vmatprep.subr.mxu0 0.0
          %1088 = vmatpush1.xpose.msra.mxu0 0.0
          %1089 = vmatprep.subr.mxu0 0.0
          %1090 = vmatpush1.xpose.msra.mxu0 %v1063
          %1091 = vmatprep.subr.mxu0 0.0
          %1092 = vmatpush1.xpose.msra.mxu0 %v1060
          %1093 = vmatprep.subr.mxu0 0.0
          %1094 = vmatpush1.xpose.msra.mxu0 %v1057
          %1095 = vmatprep.subr.mxu0 0.0
          %1096 = vmatpush1.xpose.msra.mxu0 %v1054
          %1097 = vmatprep.subr.mxu0 0.0
          %1098 = vmatpush2.xpose.msra.mxu0 0.0
          %1099 = vmatprep.subr.mxu0 0.0
          %1100 = vmatpush2.xpose.msra.mxu0 0.0
          %1101 = vmatprep.subr.mxu0 0.0
          %1102 = vmatpush2.xpose.msra.mxu0 0.0
          %1103 = vmatprep.subr.mxu0 0.0
          %1104 = vmatpush2.xpose.msra.mxu0 0.0
          %1105 = vmatprep.subr.mxu0 0.0
          %1106 = vmatpush2.xpose.msra.mxu0 0.0
          %1107 = vmatprep.subr.mxu0 0.0
          %1108 = vmatpush2.xpose.msra.mxu0 0.0
          %1109 = vmatprep.subr.mxu0 0.0
          %1110 = vmatpush2.xpose.msra.mxu0 0.0
          %1111 = vmatprep.subr.mxu0 0.0
          %1112 = vmatpush2.xpose.msra.mxu0 0.0
          %1113 = vmatprep.subr.mxu0 0.0
          %1114 = vmatpush2.xpose.msra.mxu0 0.0
          %1115 = vmatprep.subr.mxu0 0.0
          %1116 = vmatpush2.xpose.msra.mxu0 0.0
          %1117 = vmatprep.subr.mxu0 0.0
          %1118 = vmatpush2.xpose.msra.mxu0 0.0
          %1119 = vmatprep.subr.mxu0 0.0
          %1120 = vmatpush2.xpose.msra.mxu0 0.0
          %1121 = vmatprep.subr.mxu0 0.0
          %1122 = vmatpush2.xpose.msra.mxu0 0.0
          %1123 = vmatprep.subr.mxu0 0.0
          %1124 = vmatpush2.xpose.msra.mxu0 0.0
          %1125 = vmatprep.subr.mxu0 0.0
          %1126 = vmatpush2.xpose.msra.mxu0 0.0
          %1127 = vmatprep.subr.mxu0 0.0
          %1128 = vmatpush2.xpose.msra.mxu0 0.0
          %1129 = vmatprep.mubr.f32.mxu0 0.0
          %1130 = vmatmul.mubr.f32.gmra.mxu0 %v1042
          %v1131 = vpop.f32.mrf.mxu0
          %v1132 = vadd.f32 0.0, %v1131
          %v1133 = vpop.f32.mrf.mxu0
          %1134 = vmatprep.mubr.f32.mxu0 0.0
          %1135 = vmatmul.mubr.f32.gmra.mxu0 %v1045
          %v1136 = vpop.f32.mrf.mxu0
          %v1137 = vadd.f32 0.0, %v1136
          %v1138 = vpop.f32.mrf.mxu0
          %1139 = vmatprep.mubr.f32.mxu0 0.0
          %1140 = vmatmul.mubr.f32.gmra.mxu0 %v1048
          %v1141 = vpop.f32.mrf.mxu0
          %v1142 = vadd.f32 0.0, %v1141
          %v1143 = vpop.f32.mrf.mxu0
          %1144 = vmatprep.mubr.f32.mxu0 0.0
          %1145 = vmatmul.mubr.f32.gmra.mxu0 %v1051
          %v1146 = vpop.f32.mrf.mxu0
          %v1147 = vadd.f32 0.0, %v1146
          %v1148 = vpop.f32.mrf.mxu0
          %1149 = vdwg.mxu0
          %v1150 = vmul.f32 %v1132, %v1040
          %v1151 = vmul.f32 %v1137, %v1040
          %v1152 = vmul.f32 %v1142, %v1040
          %v1153 = vmul.f32 %v1147, %v1040
          %v1154 = vmul.f32 %v1000, %v1032
          %v1155 = vmul.f32 %v1001, %v1033
          %v1156 = vmul.f32 %v1002, %v1034
          %v1157 = vmul.f32 %v1003, %v1035
          %v1158 = vsel %vm491, %v1154, 0.0
          %1159 = vadd.xlane.f32.xlu0 %v1158
          %v1160 = vpop.xlane.xlu0 %1159
          %v1161 = vsel %vm491, %v1155, 0.0
          %1162 = vadd.xlane.f32.xlu0 %v1161
          %v1163 = vpop.xlane.xlu0 %1162
          %v1164 = vsel %vm491, %v1156, 0.0
          %1165 = vadd.xlane.f32.xlu0 %v1164
          %v1166 = vpop.xlane.xlu0 %1165
          %v1167 = vsel %vm491, %v1157, 0.0
          %1168 = vadd.xlane.f32.xlu0 %v1167
          %v1169 = vpop.xlane.xlu0 %1168
          %v1170 = vmul.f32 %v1160, %v1040
          %v1171 = vmul.f32 %v1163, %v1040
          %v1172 = vmul.f32 %v1166, %v1040
          %v1173 = vmul.f32 %v1169, %v1040
          %v1174 = vsel %vm491, %v1150, -inf
          %1175 = vmax.xlane.f32.xlu0 %v1174
          %v1176 = vpop.xlane.xlu0 %1175
          %v1177 = vsel %vm491, %v1151, -inf
          %1178 = vmax.xlane.f32.xlu0 %v1177
          %v1179 = vpop.xlane.xlu0 %1178
          %v1180 = vsel %vm491, %v1152, -inf
          %1181 = vmax.xlane.f32.xlu0 %v1180
          %v1182 = vpop.xlane.xlu0 %1181
          %v1183 = vsel %vm491, %v1153, -inf
          %1184 = vmax.xlane.f32.xlu0 %v1183
          %v1185 = vpop.xlane.xlu0 %1184
          %v1186 = vsub.f32 %v1150, %v1176
          %v1187 = vsub.f32 %v1151, %v1179
          %v1188 = vsub.f32 %v1152, %v1182
          %v1189 = vsub.f32 %v1153, %v1185
          %v1190 = vmul.f32 %v1186, 1.442695
          %v1191 = vpow.pop %v1190
          %v1192 = vmul.f32 %v1187, 1.442695
          %v1193 = vpow.pop %v1192
          %v1194 = vmul.f32 %v1188, 1.442695
          %v1195 = vpow.pop %v1194
          %v1196 = vmul.f32 %v1189, 1.442695
          %v1197 = vpow.pop %v1196
          %v1198 = vsel %vm491, %v1191, 0.0
          %1199 = vadd.xlane.f32.xlu0 %v1198
          %v1200 = vpop.xlane.xlu0 %1199
          %v1201 = vsel %vm491, %v1193, 0.0
          %1202 = vadd.xlane.f32.xlu0 %v1201
          %v1203 = vpop.xlane.xlu0 %1202
          %v1204 = vsel %vm491, %v1195, 0.0
          %1205 = vadd.xlane.f32.xlu0 %v1204
          %v1206 = vpop.xlane.xlu0 %1205
          %v1207 = vsel %vm491, %v1197, 0.0
          %1208 = vadd.xlane.f32.xlu0 %v1207
          %v1209 = vpop.xlane.xlu0 %1208
          %v1210 = vlog2.pop %v1200
          %v1211 = vmul.f32 %v1210, 0.6931472
          %v1212 = vlog2.pop %v1203
          %v1213 = vmul.f32 %v1212, 0.6931472
          %v1214 = vlog2.pop %v1206
          %v1215 = vmul.f32 %v1214, 0.6931472
          %v1216 = vlog2.pop %v1209
          %v1217 = vmul.f32 %v1216, 0.6931472
          %v1218 = vadd.f32 %v1176, %v1211
          %v1219 = vadd.f32 %v1179, %v1213
          %v1220 = vadd.f32 %v1182, %v1215
          %v1221 = vadd.f32 %v1185, %v1217
          %v1222 = vmax.f32 %v1174, %v1177
          %v1223 = vmax.f32 %v1180, %v1183
          %v1224 = vmax.f32 %v1222, %v1223
          %v1225 = vrot.slane %v1224, 4
          %v1226 = vmax.f32 %v1224, %v1225
          %v1227 = vrot.slane %v1226, 2
          %v1228 = vmax.f32 %v1226, %v1227
          %v1229 = vrot.slane %v1228, 1
          %v1230 = vmax.f32 %v1228, %v1229
          %v1231 = vsub.f32 %v1150, %v1230
          %v1232 = vsub.f32 %v1151, %v1230
          %v1233 = vsub.f32 %v1152, %v1230
          %v1234 = vsub.f32 %v1153, %v1230
          %v1235 = vmul.f32 %v1231, 1.442695
          %v1236 = vpow.pop %v1235
          %v1237 = vmul.f32 %v1232, 1.442695
          %v1238 = vpow.pop %v1237
          %v1239 = vmul.f32 %v1233, 1.442695
          %v1240 = vpow.pop %v1239
          %v1241 = vmul.f32 %v1234, 1.442695
          %v1242 = vpow.pop %v1241
          %v1243 = vsel %vm491, %v1236, 0.0
          %v1244 = vsel %vm491, %v1238, 0.0
          %v1245 = vadd.f32 %v1243, %v1244
          %v1246 = vsel %vm491, %v1240, 0.0
          %v1247 = vadd.f32 %v1245, %v1246
          %v1248 = vsel %vm491, %v1242, 0.0
          %v1249 = vadd.f32 %v1247, %v1248
          %v1250 = vrot.slane %v1249, 4
          %v1251 = vadd.f32 %v1249, %v1250
          %v1252 = vrot.slane %v1251, 2
          %v1253 = vadd.f32 %v1251, %v1252
          %v1254 = vrot.slane %v1253, 1
          %v1255 = vadd.f32 %v1253, %v1254
          %v1256 = vlog2.pop %v1255
          %v1257 = vmul.f32 %v1256, 0.6931472
          %v1258 = vadd.f32 %v1230, %v1257
          %v1259 = vadd.f32 %v1218, %v1219
          %v1260 = vadd.f32 %v1259, %v1220
          %v1261 = vadd.f32 %v1260, %v1221
          %v1262 = vrot.slane %v1261, 4
          %v1263 = vadd.f32 %v1261, %v1262
          %v1264 = vrot.slane %v1263, 2
          %v1265 = vadd.f32 %v1263, %v1264
          %v1266 = vrot.slane %v1265, 1
          %v1267 = vadd.f32 %v1265, %v1266
          %v1268 = vrcp.pop 32.0
          %v1269 = vmul.f32 %v1267, %v1268
          %v1270 = vsel %vm491, %v1258, 0.0
          %1271 = vadd.xlane.f32.xlu0 %v1270
          %v1272 = vpop.xlane.xlu0 %1271
          %v1273 = vmul.f32 %v1272, %v1268
          %v1274 = vadd.f32 %v1269, %v1273
          %v1275 = vmul.f32 %v1274, 0.5
          %v1276 = vadd.f32 %v1170, %v1171
          %v1277 = vadd.f32 %v1276, %v1172
          %v1278 = vadd.f32 %v1277, %v1173
          %v1279 = vrot.slane %v1278, 4
          %v1280 = vadd.f32 %v1278, %v1279
          %v1281 = vrot.slane %v1280, 2
          %v1282 = vadd.f32 %v1280, %v1281
          %v1283 = vrot.slane %v1282, 1
          %v1284 = vadd.f32 %v1282, %v1283
          %v1285 = vmul.f32 %v1284, %v1268
          %v1286 = vsub.f32 %v1275, %v1285
          %1287 = vst.msk [vmem:[%s429] sm:$0x1] %vm956, %v1286
        $region80: #{tpu_custom_call.1} parent=39 // pred_fallthru
          _
        %p1288 = scmp.ne.s32.totalorder %s34, 0
        %p1289 = pnand %p1288, %p434
        %p1290 = pneg %p1289
        // Predicated region
        $region81: #{tpu_custom_call.1} parent=39 // pred_check
          _
        $region82: #{tpu_custom_call.1} parent=39 // pred_check_branch
          %1292 = sbr.rel (%p1289) target = $region84
        $region83: #{tpu_custom_call.1} parent=39 // pred_region
          %1293 = vst.msk [vmem:[%s429] sm:$0x1] %vm956, 0.0
        $region84: #{tpu_custom_call.1} parent=39 // pred_fallthru
          _
        %p1294 = scmp.lt.s32.totalorder %s34, 1
        %s1295 = scalar_select %p1294, %s34, 1
        %s1296 = scalar_lea.vmem %s7, %s1295
        %p1297 = scmp.lt.s32.totalorder %s34, 1
        %s1298 = scalar_select %p1297, %s34, 1
        %s1299 = scalar_lea.vmem %s8, %s1298
        // Predicated region
        $region85: #{tpu_custom_call.1} parent=39 // pred_check
          %p1300 = pneg %p201
        $region86: #{tpu_custom_call.1} parent=39 // pred_check_branch
          %1302 = sbr.rel (%p1300) target = $region88
        $region87: #{tpu_custom_call.1} parent=39 // pred_region
          _
        $region88: #{tpu_custom_call.1} parent=39 // pred_fallthru
          _
        // Predicated region
        $region89: #{tpu_custom_call.1} parent=39 // pred_check
          %p1303 = pneg %p227
        $region90: #{tpu_custom_call.1} parent=39 // pred_check_branch
          %1305 = sbr.rel (%p1303) target = $region92
        $region91: #{tpu_custom_call.1} parent=39 // pred_region
          _
        $region92: #{tpu_custom_call.1} parent=39 // pred_fallthru
          _
      $region40: #{tpu_custom_call.1} parent=5 // pred_fallthru
        _
      %p1306 = scmp.le.s32.totalorder 2, %s25
      // Predicated region
      $region93: #{tpu_custom_call.1} parent=5 // pred_check
        %p1307 = pneg %p1306
      $region94: #{tpu_custom_call.1} parent=5 // pred_check_branch
        %1309 = sbr.rel (%p1307) target = $region96
      $region95: #{tpu_custom_call.1} parent=5 // pred_region
        %s1310 = ssub.s32 %s25, 2
        // Predicated region
        $region97: #{tpu_custom_call.1} parent=95 // pred_check
          %p1311 = pneg %p207
        $region98: #{tpu_custom_call.1} parent=95 // pred_check_branch
          %1313 = sbr.rel (%p1311) target = $region100
        $region99: #{tpu_custom_call.1} parent=95 // pred_region
          %p1314 = scmp.lt.s32.totalorder %s36, 1
          %s1315 = scalar_select %p1314, %s36, 1
          %s1316 = scalar_lea.vmem %s7, %s1315
        $region100: #{tpu_custom_call.1} parent=95 // pred_fallthru
          _
        // Predicated region
        $region101: #{tpu_custom_call.1} parent=95 // pred_check
          %p1317 = pneg %p233
        $region102: #{tpu_custom_call.1} parent=95 // pred_check_branch
          %1319 = sbr.rel (%p1317) target = $region104
        $region103: #{tpu_custom_call.1} parent=95 // pred_region
          %p1320 = scmp.lt.s32.totalorder %s36, 1
          %s1321 = scalar_select %p1320, %s36, 1
          %s1322 = scalar_lea.vmem %s8, %s1321
        $region104: #{tpu_custom_call.1} parent=95 // pred_fallthru
          _
      $region96: #{tpu_custom_call.1} parent=5 // pred_fallthru
        _
    $region6: #{tpu_custom_call.1} parent=1 // loop_footer
      %s29 = sadd.s32 1, %s25
    $region7: #{tpu_custom_call.1} parent=1 // loop_footer_branch
      %24 = sbr.rel target = $region3
    $region8: #{tpu_custom_call.1} parent=1 // loop_exit
      _
    %1323 = vsyncpa [#allocation8], 1
    %s1324 = scalar_lea.sflag [#allocation8], 1
    %1325 = vsyncpa %s1324, 1
    %1326 = vsyncpa [#allocation10], 1
    %s1327 = scalar_lea.sflag [#allocation10], 1
    %1328 = vsyncpa %s1327, 1
    %1329 = vsyncpa [#allocation13], 1
    %s1330 = scalar_lea.sflag [#allocation13], 1
    %1331 = vsyncpa %s1330, 1
  %1332 = vsyncmov [#allocation5]
  %s1333 = vpop.sfrf %1332
  %p1334 = scmp.eq.s32.totalorder %s1333, 0
  %p1335 = pneg %p1334
  %1337 = shalt.err (%p1335)
  %s1338 = scalar_lea.sflag [#allocation5], 1
  %1339 = vsyncmov %s1338
  %s1340 = vpop.sfrf %1339
  %p1341 = scmp.eq.s32.totalorder %s1340, 0
  %p1342 = pneg %p1341
  %1344 = shalt.err (%p1342)

</llo_original>
